<compile_context>
chip_gen: v6e
topology: v6e:2x2x1
jax: 0.10.0
libtpu: 0.0.40
codegen_flags: <defaults>
</compile_context>

<pallas_src>
import jax
import jax.numpy as jnp
import numpy as np
from jax.experimental import pallas as pl
from jax.experimental.pallas import tpu as pltpu

PAD = 5          # max inception kernel = 11 -> 'same' padding of 5
N_BRANCH = 4
C_IN = 5         # 4 data channels + 1 noise channel (cnn_in == 5)
C_OUT = 11       # inception output channels: 1+2+2+2+2+2
HID = 32         # dens1..dens4 hidden size
LANE = 128


def _round_up(n, m):
    return ((n + m - 1) // m) * m


def mynet_kernel(xd_ref, xn_ref, ind_ref, wd_ref, wn_ref,
                 w1_ref, b1_ref, w5_ref, b5_ref, out_ref):
    # xd_ref : (4, TB, Kd_pad)   flattened, zero-padded data channels per branch
    # xn_ref : (4, TB, Kn_pad)   flattened, zero-padded raw noise channel per branch
    # ind_ref: (Kd_pad, 128)     per-channel mean(x^2) indicator (cols 0..3 = 1/L)
    # wd_ref : (4, Kd_pad, Nc_pad)  Toeplitz conv (data rows, scalers folded in)
    # wn_ref : (4, Kn_pad, Nc_pad)  Toeplitz conv (noise rows, scalers folded in)
    # w1_ref : (4, Nc_pad, 128)  dens1..4, branch br nonzero only in cols [32br,32br+32)
    # b1_ref : (1, 128), w5_ref: (128, OUT_PAD), b5_ref: (1, OUT_PAD)
    # out_ref: (TB, OUT_PAD)
    ind = ind_ref[...]                                             # hoisted, loaded once
    hsum = None
    for br in range(N_BRANCH):                                     # small fixed unroll
        xd = xd_ref[br]                                            # (TB, Kd_pad)
        xn = xn_ref[br]                                            # (TB, Kn_pad)
        # per-channel mean(x^2) over length (zero pads contribute 0) -> (TB, 128)
        ms = jnp.dot(xd * xd, ind, preferred_element_type=jnp.float32)
        # 1 / max_c sqrt(mean) == rsqrt(max_c mean); eps guards all-zero padded rows
        inv = jax.lax.rsqrt(jnp.maximum(jnp.max(ms, axis=1, keepdims=True), 1e-30))
        # inception conv (all 6 Conv1d's) + flatten; scale_conv folded into Wd/Wn
        acc = (jnp.dot(xd, wd_ref[br], preferred_element_type=jnp.float32)
               + jnp.dot(xn * inv, wn_ref[br], preferred_element_type=jnp.float32))
        acc = jnp.where(acc > 0, acc, 0.05 * acc)                  # LeakyReLU(0.05)
        # dens{1..4}: disjoint 32-lane column blocks -> accumulate into (TB, 128)
        d = jnp.dot(acc, w1_ref[br], preferred_element_type=jnp.float32)
        hsum = d if hsum is None else hsum + d
    h = hsum + b1_ref[...]
    h = jnp.where(h > 0, h, 0.05 * h)                              # LeakyReLU(0.05)
    out_ref[...] = (jnp.dot(h, w5_ref[...], preferred_element_type=jnp.float32)
                    + b5_ref[...])


def _build_toeplitz(wc, scalers, L, Lp, Kd_pad, Kn_pad, Nc_pad):
    """wc: (4, 11, 5, 11) centered 11-tap kernels; scalers: (4, 5) scale_conv.
    Returns Wd (4, Kd_pad, Nc_pad) and Wn (4, Kn_pad, Nc_pad) with
      Wd[br, c*Lp + m, o*L + l] = scalers[br,c] * wc[br,o,c,m-l]  (c < 4)
      Wn[br,        m, o*L + l] = scalers[br,4] * wc[br,o,4,m-l]
    for 0 <= m-l <= 10, zero elsewhere / in padding rows & columns."""
    wc_t = jnp.transpose(wc, (0, 2, 1, 3))                     # (4, C_IN, C_OUT, 11)
    m = np.arange(Lp)[:, None]
    l = np.arange(L)[None, :]
    d = m - l                                                  # (Lp, L)
    valid = (d >= 0) & (d <= 2 * PAD)
    d_cl = np.clip(d, 0, 2 * PAD)
    g = wc_t[:, :, :, d_cl]                                    # (4, C_IN, C_OUT, Lp, L)
    g = jnp.where(jnp.asarray(valid)[None, None, None], g, 0.0)
    g = g * scalers[:, :, None, None, None]                    # fold scale_conv
    g = jnp.transpose(g, (0, 1, 3, 2, 4))                      # (4, C_IN, Lp, C_OUT, L)
    g = g.reshape(N_BRANCH, C_IN, Lp, C_OUT * L)
    wd = g[:, :4].reshape(N_BRANCH, 4 * Lp, C_OUT * L)
    wn = g[:, 4]                                               # (4, Lp, 11*L)
    wd = jnp.pad(wd, ((0, 0), (0, Kd_pad - 4 * Lp), (0, Nc_pad - C_OUT * L)))
    wn = jnp.pad(wn, ((0, 0), (0, Kn_pad - Lp), (0, Nc_pad - C_OUT * L)))
    return wd, wn


def mynet_cnn_forward(x, noise, params, tb=128):
    """x: (B, 16, L) float32, noise: (4, B, 1, L) raw randn channels."""
    scalers, wc, w1, b1, w5, b5 = params
    B, C, L = x.shape
    assert C == 16
    P = w5.shape[0]
    Lp = L + 2 * PAD
    Kd_pad = _round_up(4 * Lp, LANE)
    Kn_pad = _round_up(Lp, LANE)
    Nc_pad = _round_up(C_OUT * L, LANE)
    OUT_PAD = _round_up(max(P, 1), LANE)

    # --- batch tile: multiple of 8, <= padded batch; for very large B keep tb=128 so
    #     the grid has >=2 steps and the "parallel" axis can shard v7x's 2 TCs. ---
    tb = max(8, (tb // 8) * 8)
    tb = min(tb, _round_up(B, 8))
    assert tb % 8 == 0
    Bp = _round_up(B, tb)

    # --- glue: branch slicing, 'same' zero-padding, flattening, lane/batch padding ---
    xd_list, xn_list = [], []
    for br in range(N_BRANCH):
        xb = x[:, 4 * br:4 * (br + 1), :]                          # (B, 4, L)
        xb = jnp.pad(xb, ((0, 0), (0, 0), (PAD, PAD)))             # (B, 4, Lp)
        xd_list.append(xb.reshape(B, 4 * Lp))
        nb = jnp.pad(noise[br][:, 0, :], ((0, 0), (PAD, PAD)))     # (B, Lp)
        xn_list.append(nb)
    xd = jnp.stack(xd_list, axis=0).astype(jnp.float32)            # (4, B, 4*Lp)
    xn = jnp.stack(xn_list, axis=0).astype(jnp.float32)            # (4, B, Lp)
    xd = jnp.pad(xd, ((0, 0), (0, Bp - B), (0, Kd_pad - 4 * Lp)))
    xn = jnp.pad(xn, ((0, 0), (0, Bp - B), (0, Kn_pad - Lp)))

    # --- glue: parameter re-layout ---
    wd, wn = _build_toeplitz(wc.astype(jnp.float32), scalers.astype(jnp.float32),
                             L, Lp, Kd_pad, Kn_pad, Nc_pad)
    ind_np = np.zeros((Kd_pad, LANE), np.float32)
    for c in range(4):
        ind_np[c * Lp:(c + 1) * Lp, c] = 1.0 / L
    ind = jnp.asarray(ind_np)
    w1pad = jnp.zeros((N_BRANCH, Nc_pad, N_BRANCH * HID), jnp.float32)
    for br in range(N_BRANCH):
        w1pad = w1pad.at[br, :C_OUT * L, br * HID:(br + 1) * HID].set(w1[br].T)
    b1r = b1.reshape(1, N_BRANCH * HID).astype(jnp.float32)
    w5pad = jnp.zeros((N_BRANCH * HID, OUT_PAD), jnp.float32).at[:, :P].set(w5.T)
    b5pad = jnp.zeros((1, OUT_PAD), jnp.float32).at[0, :P].set(b5)

    out = pl.pallas_call(
        mynet_kernel,
        out_shape=jax.ShapeDtypeStruct((Bp, OUT_PAD), jnp.float32),
        grid=(Bp // tb,),
        in_specs=[
            pl.BlockSpec((N_BRANCH, tb, Kd_pad), lambda i: (0, i, 0)),
            pl.BlockSpec((N_BRANCH, tb, Kn_pad), lambda i: (0, i, 0)),
            pl.BlockSpec((Kd_pad, LANE), lambda i: (0, 0)),
            pl.BlockSpec((N_BRANCH, Kd_pad, Nc_pad), lambda i: (0, 0, 0)),
            pl.BlockSpec((N_BRANCH, Kn_pad, Nc_pad), lambda i: (0, 0, 0)),
            pl.BlockSpec((N_BRANCH, Nc_pad, N_BRANCH * HID), lambda i: (0, 0, 0)),
            pl.BlockSpec((1, N_BRANCH * HID), lambda i: (0, 0)),
            pl.BlockSpec((N_BRANCH * HID, OUT_PAD), lambda i: (0, 0)),
            pl.BlockSpec((1, OUT_PAD), lambda i: (0, 0)),
        ],
        out_specs=pl.BlockSpec((tb, OUT_PAD), lambda i: (i, 0)),
        compiler_params=pltpu.CompilerParams(
            dimension_semantics=("parallel",),            # batch tiles across TCs (v7x)
            vmem_limit_bytes=64 * 1024 * 1024),           # weights resident; tiny at small L
    )(xd, xn, ind, wd, wn, w1pad, b1r, w5pad, b5pad)
    return out[:B, :P]


def init_params(key, L, predict_out):
    """Deterministic synthetic parameters matching the PyTorch module's shapes."""
    ksizes = [1, 3, 5, 7, 9, 11]
    outchs = [1, 2, 2, 2, 2, 2]
    keys = jax.random.split(key, N_BRANCH * len(ksizes) + 4)
    ki = 0
    scalers = jnp.ones((N_BRANCH, C_IN), jnp.float32)          # scale_conv init = ones
    # embed each conv's weights (oc, 5, K) into a centered 11-tap kernel -> equivalent conv
    wc = jnp.zeros((N_BRANCH, C_OUT, C_IN, 2 * PAD + 1), jnp.float32)
    for br in range(N_BRANCH):
        row = 0
        for K, oc in zip(ksizes, outchs):
            w = jax.random.normal(keys[ki], (oc, C_IN, K), jnp.float32) * 0.2
            ki += 1
            off = (2 * PAD + 1 - K) // 2
            wc = wc.at[br, row:row + oc, :, off:off + K].set(w)
            row += oc
    w1 = jax.random.normal(keys[ki], (N_BRANCH, HID, C_OUT * L), jnp.float32) * 0.1; ki += 1
    b1 = jax.random.normal(keys[ki], (N_BRANCH, HID), jnp.float32) * 0.1; ki += 1
    w5 = jax.random.normal(keys[ki], (predict_out, N_BRANCH * HID), jnp.float32) * 0.1; ki += 1
    b5 = jax.random.normal(keys[ki], (predict_out,), jnp.float32) * 0.1; ki += 1
    return scalers, wc, w1, b1, w5, b5


def reference_forward(x, noise, params):
    """Pure-JAX reference mirroring the PyTorch forward (same noise / weights)."""
    scalers, wc, w1, b1, w5, b5 = params
    B, _, L = x.shape
    feats = []
    for br in range(N_BRANCH):
        xb = x[:, 4 * br:4 * (br + 1), :]
        rms = jnp.sqrt(jnp.mean(xb ** 2, axis=2))              # (B, 4)
        inv = 1.0 / jnp.max(rms, axis=1)                       # (B,)
        n = noise[br] * inv[:, None, None]
        xc = jnp.concatenate([xb, n], axis=1) * scalers[br][None, :, None]
        y = jax.lax.conv_general_dilated(
            xc, wc[br], window_strides=(1,), padding=[(PAD, PAD)],
            dimension_numbers=('NCH', 'OIH', 'NCH'))           # (B, 11, L)
        y = jnp.where(y > 0, y, 0.05 * y)
        flat = y.reshape(B, C_OUT * L)
        h = flat @ w1[br].T + b1[br]
        h = jnp.where(h > 0, h, 0.05 * h)
        feats.append(h)
    feat = jnp.concatenate(feats, axis=1)                      # (B, 128)
    return feat @ w5.T + b5


if __name__ == "__main__":
    key = jax.random.PRNGKey(0)
    kx, kn, kp = jax.random.split(key, 3)
    B, L, P = 2, 8, 3          # batch=2, k=8 (sequence length), predict_out=3
    x = jax.random.normal(kx, (B, 16, L), jnp.float32)
    # TODO(synk): torch.randn(...) inside forward has no in-kernel equivalent here;
    # deterministic noise is generated outside and fed to both kernel and reference.
    noise = jax.random.normal(kn, (N_BRANCH, B, 1, L), jnp.float32)
    params = init_params(kp, L, P)

    out = mynet_cnn_forward(x, noise, params)
    out = jax.block_until_ready(out)

    ref = reference_forward(x, noise, params)
    np.testing.assert_allclose(np.asarray(out), np.asarray(ref), atol=2e-3, rtol=2e-3)
    print("KERNEL_OK")
</pallas_src>

<mosaic_0001>
module attributes {stable_mosaic.version = 11 : i64} {
  func.func @mynet_kernel(%arg0: i32, %arg1: memref<4x8x128xf32, #tpu.memory_space<vmem>>, %arg2: memref<4x8x128xf32, #tpu.memory_space<vmem>>, %arg3: memref<128x128xf32, #tpu.memory_space<vmem>>, %arg4: memref<4x128x128xf32, #tpu.memory_space<vmem>>, %arg5: memref<4x128x128xf32, #tpu.memory_space<vmem>>, %arg6: memref<4x128x128xf32, #tpu.memory_space<vmem>>, %arg7: memref<1x128xf32, #tpu.memory_space<vmem>>, %arg8: memref<128x128xf32, #tpu.memory_space<vmem>>, %arg9: memref<1x128xf32, #tpu.memory_space<vmem>>, %arg10: memref<8x128xf32, #tpu.memory_space<vmem>>) attributes {dimension_semantics = [#tpu.dimension_semantics<parallel>], iteration_bounds = array<i64: 1>, scalar_prefetch = 0 : i64, scratch_operands = 0 : i64, tpu.core_type = #tpu.core_type<tc>, window_params = [{transform_indices = @transform_0, window_bounds = array<i64: 4, 8, 128>}, {transform_indices = @transform_1, window_bounds = array<i64: 4, 8, 128>}, {pipeline_mode = #tpu.pipeline_mode<synchronous>, transform_indices = @transform_2, window_bounds = array<i64: 128, 128>}, {pipeline_mode = #tpu.pipeline_mode<synchronous>, transform_indices = @transform_3, window_bounds = array<i64: 4, 128, 128>}, {pipeline_mode = #tpu.pipeline_mode<synchronous>, transform_indices = @transform_4, window_bounds = array<i64: 4, 128, 128>}, {pipeline_mode = #tpu.pipeline_mode<synchronous>, transform_indices = @transform_5, window_bounds = array<i64: 4, 128, 128>}, {pipeline_mode = #tpu.pipeline_mode<synchronous>, transform_indices = @transform_6, window_bounds = array<i64: 1, 128>}, {pipeline_mode = #tpu.pipeline_mode<synchronous>, transform_indices = @transform_7, window_bounds = array<i64: 128, 128>}, {pipeline_mode = #tpu.pipeline_mode<synchronous>, transform_indices = @transform_8, window_bounds = array<i64: 1, 128>}, {transform_indices = @transform_9, window_bounds = array<i64: 8, 128>}]} {
    %c0 = arith.constant 0 : index
    %c0_0 = arith.constant 0 : index
    %0 = vector.load %arg3[%c0, %c0_0] : memref<128x128xf32, #tpu.memory_space<vmem>>, vector<128x128xf32>
    %c0_1 = arith.constant 0 : index
    %c0_2 = arith.constant 0 : index
    %c0_3 = arith.constant 0 : index
    %1 = vector.load %arg1[%c0_1, %c0_2, %c0_3] : memref<4x8x128xf32, #tpu.memory_space<vmem>>, vector<1x8x128xf32>
    %2 = vector.shape_cast %1 : vector<1x8x128xf32> to vector<8x128xf32>
    %c0_4 = arith.constant 0 : index
    %c0_5 = arith.constant 0 : index
    %c0_6 = arith.constant 0 : index
    %3 = vector.load %arg2[%c0_4, %c0_5, %c0_6] : memref<4x8x128xf32, #tpu.memory_space<vmem>>, vector<1x8x128xf32>
    %4 = vector.shape_cast %3 : vector<1x8x128xf32> to vector<8x128xf32>
    %5 = arith.mulf %2, %2 : vector<8x128xf32>
    %cst = arith.constant dense<0.000000e+00> : vector<8x128xf32>
    %6 = tpu.matmul %5, %0, %cst {dimension_numbers = #tpu.dot_dimension_numbers<[1], [0], [0], [1], [0, 0, 1, 1], [], []>} : vector<8x128xf32>, vector<128x128xf32>, vector<8x128xf32> -> vector<8x128xf32>
    %cst_7 = arith.constant dense<0xFF800000> : vector<8xf32>
    %7 = vector.multi_reduction <maximumf>, %6, %cst_7 [1] : vector<8x128xf32> to vector<8xf32>
    %8 = vector.shape_cast %7 : vector<8xf32> to vector<8x1xf32>
    %cst_8 = arith.constant 1.000000e-30 : f32
    %9 = vector.broadcast %cst_8 : f32 to vector<8x1xf32>
    %10 = arith.maximumf %8, %9 : vector<8x1xf32>
    %11 = math.rsqrt %10 : vector<8x1xf32>
    %c0_9 = arith.constant 0 : index
    %c0_10 = arith.constant 0 : index
    %c0_11 = arith.constant 0 : index
    %12 = vector.load %arg4[%c0_9, %c0_10, %c0_11] : memref<4x128x128xf32, #tpu.memory_space<vmem>>, vector<1x128x128xf32>
    %13 = vector.shape_cast %12 : vector<1x128x128xf32> to vector<128x128xf32>
    %cst_12 = arith.constant dense<0.000000e+00> : vector<8x128xf32>
    %14 = tpu.matmul %2, %13, %cst_12 {dimension_numbers = #tpu.dot_dimension_numbers<[1], [0], [0], [1], [0, 0, 1, 1], [], []>} : vector<8x128xf32>, vector<128x128xf32>, vector<8x128xf32> -> vector<8x128xf32>
    %15 = vector.broadcast %11 : vector<8x1xf32> to vector<8x128xf32>
    %16 = arith.mulf %4, %15 : vector<8x128xf32>
    %c0_13 = arith.constant 0 : index
    %c0_14 = arith.constant 0 : index
    %c0_15 = arith.constant 0 : index
    %17 = vector.load %arg5[%c0_13, %c0_14, %c0_15] : memref<4x128x128xf32, #tpu.memory_space<vmem>>, vector<1x128x128xf32>
    %18 = vector.shape_cast %17 : vector<1x128x128xf32> to vector<128x128xf32>
    %cst_16 = arith.constant dense<0.000000e+00> : vector<8x128xf32>
    %19 = tpu.matmul %16, %18, %cst_16 {dimension_numbers = #tpu.dot_dimension_numbers<[1], [0], [0], [1], [0, 0, 1, 1], [], []>} : vector<8x128xf32>, vector<128x128xf32>, vector<8x128xf32> -> vector<8x128xf32>
    %20 = arith.addf %14, %19 : vector<8x128xf32>
    %cst_17 = arith.constant 0.000000e+00 : f32
    %21 = vector.broadcast %cst_17 : f32 to vector<8x128xf32>
    %22 = arith.cmpf ogt, %20, %21 : vector<8x128xf32>
    %cst_18 = arith.constant 5.000000e-02 : f32
    %23 = vector.broadcast %cst_18 : f32 to vector<8x128xf32>
    %24 = arith.mulf %23, %20 : vector<8x128xf32>
    %25 = arith.select %22, %20, %24 : vector<8x128xi1>, vector<8x128xf32>
    %c0_19 = arith.constant 0 : index
    %c0_20 = arith.constant 0 : index
    %c0_21 = arith.constant 0 : index
    %26 = vector.load %arg6[%c0_19, %c0_20, %c0_21] : memref<4x128x128xf32, #tpu.memory_space<vmem>>, vector<1x128x128xf32>
    %27 = vector.shape_cast %26 : vector<1x128x128xf32> to vector<128x128xf32>
    %cst_22 = arith.constant dense<0.000000e+00> : vector<8x128xf32>
    %28 = tpu.matmul %25, %27, %cst_22 {dimension_numbers = #tpu.dot_dimension_numbers<[1], [0], [0], [1], [0, 0, 1, 1], [], []>} : vector<8x128xf32>, vector<128x128xf32>, vector<8x128xf32> -> vector<8x128xf32>
    %c1 = arith.constant 1 : index
    %c0_23 = arith.constant 0 : index
    %c0_24 = arith.constant 0 : index
    %29 = vector.load %arg1[%c1, %c0_23, %c0_24] : memref<4x8x128xf32, #tpu.memory_space<vmem>>, vector<1x8x128xf32>
    %30 = vector.shape_cast %29 : vector<1x8x128xf32> to vector<8x128xf32>
    %c1_25 = arith.constant 1 : index
    %c0_26 = arith.constant 0 : index
    %c0_27 = arith.constant 0 : index
    %31 = vector.load %arg2[%c1_25, %c0_26, %c0_27] : memref<4x8x128xf32, #tpu.memory_space<vmem>>, vector<1x8x128xf32>
    %32 = vector.shape_cast %31 : vector<1x8x128xf32> to vector<8x128xf32>
    %33 = arith.mulf %30, %30 : vector<8x128xf32>
    %cst_28 = arith.constant dense<0.000000e+00> : vector<8x128xf32>
    %34 = tpu.matmul %33, %0, %cst_28 {dimension_numbers = #tpu.dot_dimension_numbers<[1], [0], [0], [1], [0, 0, 1, 1], [], []>} : vector<8x128xf32>, vector<128x128xf32>, vector<8x128xf32> -> vector<8x128xf32>
    %cst_29 = arith.constant dense<0xFF800000> : vector<8xf32>
    %35 = vector.multi_reduction <maximumf>, %34, %cst_29 [1] : vector<8x128xf32> to vector<8xf32>
    %36 = vector.shape_cast %35 : vector<8xf32> to vector<8x1xf32>
    %cst_30 = arith.constant 1.000000e-30 : f32
    %37 = vector.broadcast %cst_30 : f32 to vector<8x1xf32>
    %38 = arith.maximumf %36, %37 : vector<8x1xf32>
    %39 = math.rsqrt %38 : vector<8x1xf32>
    %c1_31 = arith.constant 1 : index
    %c0_32 = arith.constant 0 : index
    %c0_33 = arith.constant 0 : index
    %40 = vector.load %arg4[%c1_31, %c0_32, %c0_33] : memref<4x128x128xf32, #tpu.memory_space<vmem>>, vector<1x128x128xf32>
    %41 = vector.shape_cast %40 : vector<1x128x128xf32> to vector<128x128xf32>
    %cst_34 = arith.constant dense<0.000000e+00> : vector<8x128xf32>
    %42 = tpu.matmul %30, %41, %cst_34 {dimension_numbers = #tpu.dot_dimension_numbers<[1], [0], [0], [1], [0, 0, 1, 1], [], []>} : vector<8x128xf32>, vector<128x128xf32>, vector<8x128xf32> -> vector<8x128xf32>
    %43 = vector.broadcast %39 : vector<8x1xf32> to vector<8x128xf32>
    %44 = arith.mulf %32, %43 : vector<8x128xf32>
    %c1_35 = arith.constant 1 : index
    %c0_36 = arith.constant 0 : index
    %c0_37 = arith.constant 0 : index
    %45 = vector.load %arg5[%c1_35, %c0_36, %c0_37] : memref<4x128x128xf32, #tpu.memory_space<vmem>>, vector<1x128x128xf32>
    %46 = vector.shape_cast %45 : vector<1x128x128xf32> to vector<128x128xf32>
    %cst_38 = arith.constant dense<0.000000e+00> : vector<8x128xf32>
    %47 = tpu.matmul %44, %46, %cst_38 {dimension_numbers = #tpu.dot_dimension_numbers<[1], [0], [0], [1], [0, 0, 1, 1], [], []>} : vector<8x128xf32>, vector<128x128xf32>, vector<8x128xf32> -> vector<8x128xf32>
    %48 = arith.addf %42, %47 : vector<8x128xf32>
    %cst_39 = arith.constant 0.000000e+00 : f32
    %49 = vector.broadcast %cst_39 : f32 to vector<8x128xf32>
    %50 = arith.cmpf ogt, %48, %49 : vector<8x128xf32>
    %cst_40 = arith.constant 5.000000e-02 : f32
    %51 = vector.broadcast %cst_40 : f32 to vector<8x128xf32>
    %52 = arith.mulf %51, %48 : vector<8x128xf32>
    %53 = arith.select %50, %48, %52 : vector<8x128xi1>, vector<8x128xf32>
    %c1_41 = arith.constant 1 : index
    %c0_42 = arith.constant 0 : index
    %c0_43 = arith.constant 0 : index
    %54 = vector.load %arg6[%c1_41, %c0_42, %c0_43] : memref<4x128x128xf32, #tpu.memory_space<vmem>>, vector<1x128x128xf32>
    %55 = vector.shape_cast %54 : vector<1x128x128xf32> to vector<128x128xf32>
    %cst_44 = arith.constant dense<0.000000e+00> : vector<8x128xf32>
    %56 = tpu.matmul %53, %55, %cst_44 {dimension_numbers = #tpu.dot_dimension_numbers<[1], [0], [0], [1], [0, 0, 1, 1], [], []>} : vector<8x128xf32>, vector<128x128xf32>, vector<8x128xf32> -> vector<8x128xf32>
    %57 = arith.addf %28, %56 : vector<8x128xf32>
    %c2 = arith.constant 2 : index
    %c0_45 = arith.constant 0 : index
    %c0_46 = arith.constant 0 : index
    %58 = vector.load %arg1[%c2, %c0_45, %c0_46] : memref<4x8x128xf32, #tpu.memory_space<vmem>>, vector<1x8x128xf32>
    %59 = vector.shape_cast %58 : vector<1x8x128xf32> to vector<8x128xf32>
    %c2_47 = arith.constant 2 : index
    %c0_48 = arith.constant 0 : index
    %c0_49 = arith.constant 0 : index
    %60 = vector.load %arg2[%c2_47, %c0_48, %c0_49] : memref<4x8x128xf32, #tpu.memory_space<vmem>>, vector<1x8x128xf32>
    %61 = vector.shape_cast %60 : vector<1x8x128xf32> to vector<8x128xf32>
    %62 = arith.mulf %59, %59 : vector<8x128xf32>
    %cst_50 = arith.constant dense<0.000000e+00> : vector<8x128xf32>
    %63 = tpu.matmul %62, %0, %cst_50 {dimension_numbers = #tpu.dot_dimension_numbers<[1], [0], [0], [1], [0, 0, 1, 1], [], []>} : vector<8x128xf32>, vector<128x128xf32>, vector<8x128xf32> -> vector<8x128xf32>
    %cst_51 = arith.constant dense<0xFF800000> : vector<8xf32>
    %64 = vector.multi_reduction <maximumf>, %63, %cst_51 [1] : vector<8x128xf32> to vector<8xf32>
    %65 = vector.shape_cast %64 : vector<8xf32> to vector<8x1xf32>
    %cst_52 = arith.constant 1.000000e-30 : f32
    %66 = vector.broadcast %cst_52 : f32 to vector<8x1xf32>
    %67 = arith.maximumf %65, %66 : vector<8x1xf32>
    %68 = math.rsqrt %67 : vector<8x1xf32>
    %c2_53 = arith.constant 2 : index
    %c0_54 = arith.constant 0 : index
    %c0_55 = arith.constant 0 : index
    %69 = vector.load %arg4[%c2_53, %c0_54, %c0_55] : memref<4x128x128xf32, #tpu.memory_space<vmem>>, vector<1x128x128xf32>
    %70 = vector.shape_cast %69 : vector<1x128x128xf32> to vector<128x128xf32>
    %cst_56 = arith.constant dense<0.000000e+00> : vector<8x128xf32>
    %71 = tpu.matmul %59, %70, %cst_56 {dimension_numbers = #tpu.dot_dimension_numbers<[1], [0], [0], [1], [0, 0, 1, 1], [], []>} : vector<8x128xf32>, vector<128x128xf32>, vector<8x128xf32> -> vector<8x128xf32>
    %72 = vector.broadcast %68 : vector<8x1xf32> to vector<8x128xf32>
    %73 = arith.mulf %61, %72 : vector<8x128xf32>
    %c2_57 = arith.constant 2 : index
    %c0_58 = arith.constant 0 : index
    %c0_59 = arith.constant 0 : index
    %74 = vector.load %arg5[%c2_57, %c0_58, %c0_59] : memref<4x128x128xf32, #tpu.memory_space<vmem>>, vector<1x128x128xf32>
    %75 = vector.shape_cast %74 : vector<1x128x128xf32> to vector<128x128xf32>
    %cst_60 = arith.constant dense<0.000000e+00> : vector<8x128xf32>
    %76 = tpu.matmul %73, %75, %cst_60 {dimension_numbers = #tpu.dot_dimension_numbers<[1], [0], [0], [1], [0, 0, 1, 1], [], []>} : vector<8x128xf32>, vector<128x128xf32>, vector<8x128xf32> -> vector<8x128xf32>
    %77 = arith.addf %71, %76 : vector<8x128xf32>
    %cst_61 = arith.constant 0.000000e+00 : f32
    %78 = vector.broadcast %cst_61 : f32 to vector<8x128xf32>
    %79 = arith.cmpf ogt, %77, %78 : vector<8x128xf32>
    %cst_62 = arith.constant 5.000000e-02 : f32
    %80 = vector.broadcast %cst_62 : f32 to vector<8x128xf32>
    %81 = arith.mulf %80, %77 : vector<8x128xf32>
    %82 = arith.select %79, %77, %81 : vector<8x128xi1>, vector<8x128xf32>
    %c2_63 = arith.constant 2 : index
    %c0_64 = arith.constant 0 : index
    %c0_65 = arith.constant 0 : index
    %83 = vector.load %arg6[%c2_63, %c0_64, %c0_65] : memref<4x128x128xf32, #tpu.memory_space<vmem>>, vector<1x128x128xf32>
    %84 = vector.shape_cast %83 : vector<1x128x128xf32> to vector<128x128xf32>
    %cst_66 = arith.constant dense<0.000000e+00> : vector<8x128xf32>
    %85 = tpu.matmul %82, %84, %cst_66 {dimension_numbers = #tpu.dot_dimension_numbers<[1], [0], [0], [1], [0, 0, 1, 1], [], []>} : vector<8x128xf32>, vector<128x128xf32>, vector<8x128xf32> -> vector<8x128xf32>
    %86 = arith.addf %57, %85 : vector<8x128xf32>
    %c3 = arith.constant 3 : index
    %c0_67 = arith.constant 0 : index
    %c0_68 = arith.constant 0 : index
    %87 = vector.load %arg1[%c3, %c0_67, %c0_68] : memref<4x8x128xf32, #tpu.memory_space<vmem>>, vector<1x8x128xf32>
    %88 = vector.shape_cast %87 : vector<1x8x128xf32> to vector<8x128xf32>
    %c3_69 = arith.constant 3 : index
    %c0_70 = arith.constant 0 : index
    %c0_71 = arith.constant 0 : index
    %89 = vector.load %arg2[%c3_69, %c0_70, %c0_71] : memref<4x8x128xf32, #tpu.memory_space<vmem>>, vector<1x8x128xf32>
    %90 = vector.shape_cast %89 : vector<1x8x128xf32> to vector<8x128xf32>
    %91 = arith.mulf %88, %88 : vector<8x128xf32>
    %cst_72 = arith.constant dense<0.000000e+00> : vector<8x128xf32>
    %92 = tpu.matmul %91, %0, %cst_72 {dimension_numbers = #tpu.dot_dimension_numbers<[1], [0], [0], [1], [0, 0, 1, 1], [], []>} : vector<8x128xf32>, vector<128x128xf32>, vector<8x128xf32> -> vector<8x128xf32>
    %cst_73 = arith.constant dense<0xFF800000> : vector<8xf32>
    %93 = vector.multi_reduction <maximumf>, %92, %cst_73 [1] : vector<8x128xf32> to vector<8xf32>
    %94 = vector.shape_cast %93 : vector<8xf32> to vector<8x1xf32>
    %cst_74 = arith.constant 1.000000e-30 : f32
    %95 = vector.broadcast %cst_74 : f32 to vector<8x1xf32>
    %96 = arith.maximumf %94, %95 : vector<8x1xf32>
    %97 = math.rsqrt %96 : vector<8x1xf32>
    %c3_75 = arith.constant 3 : index
    %c0_76 = arith.constant 0 : index
    %c0_77 = arith.constant 0 : index
    %98 = vector.load %arg4[%c3_75, %c0_76, %c0_77] : memref<4x128x128xf32, #tpu.memory_space<vmem>>, vector<1x128x128xf32>
    %99 = vector.shape_cast %98 : vector<1x128x128xf32> to vector<128x128xf32>
    %cst_78 = arith.constant dense<0.000000e+00> : vector<8x128xf32>
    %100 = tpu.matmul %88, %99, %cst_78 {dimension_numbers = #tpu.dot_dimension_numbers<[1], [0], [0], [1], [0, 0, 1, 1], [], []>} : vector<8x128xf32>, vector<128x128xf32>, vector<8x128xf32> -> vector<8x128xf32>
    %101 = vector.broadcast %97 : vector<8x1xf32> to vector<8x128xf32>
    %102 = arith.mulf %90, %101 : vector<8x128xf32>
    %c3_79 = arith.constant 3 : index
    %c0_80 = arith.constant 0 : index
    %c0_81 = arith.constant 0 : index
    %103 = vector.load %arg5[%c3_79, %c0_80, %c0_81] : memref<4x128x128xf32, #tpu.memory_space<vmem>>, vector<1x128x128xf32>
    %104 = vector.shape_cast %103 : vector<1x128x128xf32> to vector<128x128xf32>
    %cst_82 = arith.constant dense<0.000000e+00> : vector<8x128xf32>
    %105 = tpu.matmul %102, %104, %cst_82 {dimension_numbers = #tpu.dot_dimension_numbers<[1], [0], [0], [1], [0, 0, 1, 1], [], []>} : vector<8x128xf32>, vector<128x128xf32>, vector<8x128xf32> -> vector<8x128xf32>
    %106 = arith.addf %100, %105 : vector<8x128xf32>
    %cst_83 = arith.constant 0.000000e+00 : f32
    %107 = vector.broadcast %cst_83 : f32 to vector<8x128xf32>
    %108 = arith.cmpf ogt, %106, %107 : vector<8x128xf32>
    %cst_84 = arith.constant 5.000000e-02 : f32
    %109 = vector.broadcast %cst_84 : f32 to vector<8x128xf32>
    %110 = arith.mulf %109, %106 : vector<8x128xf32>
    %111 = arith.select %108, %106, %110 : vector<8x128xi1>, vector<8x128xf32>
    %c3_85 = arith.constant 3 : index
    %c0_86 = arith.constant 0 : index
    %c0_87 = arith.constant 0 : index
    %112 = vector.load %arg6[%c3_85, %c0_86, %c0_87] : memref<4x128x128xf32, #tpu.memory_space<vmem>>, vector<1x128x128xf32>
    %113 = vector.shape_cast %112 : vector<1x128x128xf32> to vector<128x128xf32>
    %cst_88 = arith.constant dense<0.000000e+00> : vector<8x128xf32>
    %114 = tpu.matmul %111, %113, %cst_88 {dimension_numbers = #tpu.dot_dimension_numbers<[1], [0], [0], [1], [0, 0, 1, 1], [], []>} : vector<8x128xf32>, vector<128x128xf32>, vector<8x128xf32> -> vector<8x128xf32>
    %115 = arith.addf %86, %114 : vector<8x128xf32>
    %c0_89 = arith.constant 0 : index
    %c0_90 = arith.constant 0 : index
    %116 = vector.load %arg7[%c0_89, %c0_90] : memref<1x128xf32, #tpu.memory_space<vmem>>, vector<1x128xf32>
    %117 = vector.broadcast %116 : vector<1x128xf32> to vector<8x128xf32>
    %118 = arith.addf %115, %117 : vector<8x128xf32>
    %cst_91 = arith.constant 0.000000e+00 : f32
    %119 = vector.broadcast %cst_91 : f32 to vector<8x128xf32>
    %120 = arith.cmpf ogt, %118, %119 : vector<8x128xf32>
    %cst_92 = arith.constant 5.000000e-02 : f32
    %121 = vector.broadcast %cst_92 : f32 to vector<8x128xf32>
    %122 = arith.mulf %121, %118 : vector<8x128xf32>
    %123 = arith.select %120, %118, %122 : vector<8x128xi1>, vector<8x128xf32>
    %c0_93 = arith.constant 0 : index
    %c0_94 = arith.constant 0 : index
    %124 = vector.load %arg8[%c0_93, %c0_94] : memref<128x128xf32, #tpu.memory_space<vmem>>, vector<128x128xf32>
    %cst_95 = arith.constant dense<0.000000e+00> : vector<8x128xf32>
    %125 = tpu.matmul %123, %124, %cst_95 {dimension_numbers = #tpu.dot_dimension_numbers<[1], [0], [0], [1], [0, 0, 1, 1], [], []>} : vector<8x128xf32>, vector<128x128xf32>, vector<8x128xf32> -> vector<8x128xf32>
    %c0_96 = arith.constant 0 : index
    %c0_97 = arith.constant 0 : index
    %126 = vector.load %arg9[%c0_96, %c0_97] : memref<1x128xf32, #tpu.memory_space<vmem>>, vector<1x128xf32>
    %127 = vector.broadcast %126 : vector<1x128xf32> to vector<8x128xf32>
    %128 = arith.addf %125, %127 : vector<8x128xf32>
    %c0_98 = arith.constant 0 : index
    %c0_99 = arith.constant 0 : index
    %129 = vector.load %arg10[%c0_98, %c0_99] : memref<8x128xf32, #tpu.memory_space<vmem>>, vector<8x128xf32>
    tpu.vector_store %arg10[%c0_98, %c0_99], %128 {strides = array<i32>} : memref<8x128xf32, #tpu.memory_space<vmem>>, vector<8x128xf32>,
    return
  }
  func.func @transform_0(%arg0: i32) -> (i32, i32, i32) {
    %c0_i32 = arith.constant 0 : i32
    %c0_i32_0 = arith.constant 0 : i32
    %c0_i32_1 = arith.constant 0 : i32
    return %c0_i32, %arg0, %c0_i32_0 : i32, i32, i32
  }
  func.func @transform_1(%arg0: i32) -> (i32, i32, i32) {
    %c0_i32 = arith.constant 0 : i32
    %c0_i32_0 = arith.constant 0 : i32
    %c0_i32_1 = arith.constant 0 : i32
    return %c0_i32, %arg0, %c0_i32_0 : i32, i32, i32
  }
  func.func @transform_2(%arg0: i32) -> (i32, i32) {
    %c0_i32 = arith.constant 0 : i32
    %c0_i32_0 = arith.constant 0 : i32
    %c0_i32_1 = arith.constant 0 : i32
    return %c0_i32, %c0_i32_0 : i32, i32
  }
  func.func @transform_3(%arg0: i32) -> (i32, i32, i32) {
    %c0_i32 = arith.constant 0 : i32
    %c0_i32_0 = arith.constant 0 : i32
    %c0_i32_1 = arith.constant 0 : i32
    %c0_i32_2 = arith.constant 0 : i32
    return %c0_i32, %c0_i32_0, %c0_i32_1 : i32, i32, i32
  }
  func.func @transform_4(%arg0: i32) -> (i32, i32, i32) {
    %c0_i32 = arith.constant 0 : i32
    %c0_i32_0 = arith.constant 0 : i32
    %c0_i32_1 = arith.constant 0 : i32
    %c0_i32_2 = arith.constant 0 : i32
    return %c0_i32, %c0_i32_0, %c0_i32_1 : i32, i32, i32
  }
  func.func @transform_5(%arg0: i32) -> (i32, i32, i32) {
    %c0_i32 = arith.constant 0 : i32
    %c0_i32_0 = arith.constant 0 : i32
    %c0_i32_1 = arith.constant 0 : i32
    %c0_i32_2 = arith.constant 0 : i32
    return %c0_i32, %c0_i32_0, %c0_i32_1 : i32, i32, i32
  }
  func.func @transform_6(%arg0: i32) -> (i32, i32) {
    %c0_i32 = arith.constant 0 : i32
    %c0_i32_0 = arith.constant 0 : i32
    %c0_i32_1 = arith.constant 0 : i32
    return %c0_i32, %c0_i32_0 : i32, i32
  }
  func.func @transform_7(%arg0: i32) -> (i32, i32) {
    %c0_i32 = arith.constant 0 : i32
    %c0_i32_0 = arith.constant 0 : i32
    %c0_i32_1 = arith.constant 0 : i32
    return %c0_i32, %c0_i32_0 : i32, i32
  }
  func.func @transform_8(%arg0: i32) -> (i32, i32) {
    %c0_i32 = arith.constant 0 : i32
    %c0_i32_0 = arith.constant 0 : i32
    %c0_i32_1 = arith.constant 0 : i32
    return %c0_i32, %c0_i32_0 : i32, i32
  }
  func.func @transform_9(%arg0: i32) -> (i32, i32) {
    %c0_i32 = arith.constant 0 : i32
    %c0_i32_0 = arith.constant 0 : i32
    return %arg0, %c0_i32 : i32, i32
  }
}

</mosaic_0001>

<llo_original>
// kernel: tpu_custom_call.1
$region0: #{tpu_custom_call.1}
  #allocation0 [shape = 'u32[]', space=smem, size = 0x4, offset = 0x4, fixed_abs, tag = 'smem constant byte address 0x4 - core index']
  #allocation1 [shape = 'u32[144,128]{1,0:T(1,128)}', space=vmem, size = 0x12000, scoped, tag = 'internal scratch']
  %s0 = inlined_call_operand.hbm [shape: f32[4,8,128], index: 0, kind: input, shape index: {}]
  %s1 = inlined_call_operand.hbm [shape: f32[4,8,128], index: 1, kind: input, shape index: {}]
  %s2 = inlined_call_operand.hbm [shape: f32[128,128], index: 2, kind: input, shape index: {}]
  %s3 = inlined_call_operand.hbm [shape: f32[4,128,128], index: 3, kind: input, shape index: {}]
  %s4 = inlined_call_operand.hbm [shape: f32[4,128,128], index: 4, kind: input, shape index: {}]
  %s5 = inlined_call_operand.hbm [shape: f32[4,128,128], index: 5, kind: input, shape index: {}]
  %s6 = inlined_call_operand.vmem [shape: f32[1,128], index: 6, kind: input, shape index: {}]
  %s7 = inlined_call_operand.hbm [shape: f32[128,128], index: 7, kind: input, shape index: {}]
  %s8 = inlined_call_operand.vmem [shape: f32[1,128], index: 8, kind: input, shape index: {}]
  %s9 = inlined_call_operand.hbm [shape: f32[8,128], index: 9, kind: output, shape index: {}]
  %s10 = sld [smem:[#allocation0]]
  $region74: #{tpu_custom_call.1} parent=0
    _
  %s12 = ssub.s32 1, %s10
  %s13 = scalar_select 0, %s12, %s10
  $region1: #{tpu_custom_call.1} parent=0
    #allocation2 [shape = 'u8[16384]{0}', space=vmem, size = 0x4000, scoped, tag = 'input window, operand 0, single buffered']
    #allocation3 [shape = 's32[1]{0}', space=sflag, size = 0x4, scoped, tag = 'scoped memory for tpu_custom_call.1']
    #allocation4 [shape = 's32[1]{0}', space=sflag, size = 0x4, scoped, tag = 'scoped memory for tpu_custom_call.1']
    #allocation5 [shape = 'u8[16384]{0}', space=vmem, size = 0x4000, scoped, tag = 'input window, operand 1, single buffered']
    #allocation6 [shape = 's32[1]{0}', space=sflag, size = 0x4, scoped, tag = 'scoped memory for tpu_custom_call.1']
    #allocation7 [shape = 'u8[65536]{0}', space=vmem, size = 0x10000, scoped, tag = 'input window, operand 2, single buffered']
    #allocation8 [shape = 'u8[262144]{0}', space=vmem, size = 0x40000, scoped, tag = 'input window, operand 3, single buffered']
    #allocation9 [shape = 's32[1]{0}', space=sflag, size = 0x4, scoped, tag = 'scoped memory for tpu_custom_call.1']
    #allocation10 [shape = 'u8[262144]{0}', space=vmem, size = 0x40000, scoped, tag = 'input window, operand 4, single buffered']
    #allocation11 [shape = 'u8[262144]{0}', space=vmem, size = 0x40000, scoped, tag = 'input window, operand 5, single buffered']
    #allocation12 [shape = 's32[1]{0}', space=sflag, size = 0x4, scoped, tag = 'scoped memory for tpu_custom_call.1']
    #allocation13 [shape = 'u8[65536]{0}', space=vmem, size = 0x10000, scoped, tag = 'input window, operand 7, single buffered']
    #allocation14 [shape = 'u8[4096]{0}', space=vmem, size = 0x1000, scoped, tag = 'output window, operand 0, single buffered']
    %14 = vsyncpa [#allocation3], 0
    %15 = vsyncpa [#allocation6], 0
    %16 = vsyncpa [#allocation9], 0
    %17 = vsyncpa [#allocation12], 0
    %18 = vsyncpa [#allocation4], 0
    // Predicated region
    $region2: #{tpu_custom_call.1} parent=1 // pred_check
      _
    $region3: #{tpu_custom_call.1} parent=1 // pred_check_branch
      %20 = sbr.rel (0) target = $region5
    $region4: #{tpu_custom_call.1} parent=1 // pred_region
      %s22 = ssub.s32 512, 512
      %23 = vsyncadd [#allocation3], %s22
      %s24 = sshll.u32 [#allocation2], 4
      %s25 = int_to_ptr.vmem [resolvable:$true] %s24
      %30 = dma.hbm_to_vmem [thread:$0]  %s0, 512, %s25, [#allocation3], 128, 128, 8
    $region5: #{tpu_custom_call.1} parent=1 // pred_fallthru
      _
    // Predicated region
    $region6: #{tpu_custom_call.1} parent=1 // pred_check
      _
    $region7: #{tpu_custom_call.1} parent=1 // pred_check_branch
      %32 = sbr.rel (0) target = $region9
    $region8: #{tpu_custom_call.1} parent=1 // pred_region
      %s34 = ssub.s32 512, 512
      %35 = vsyncadd [#allocation6], %s34
      %s36 = sshll.u32 [#allocation5], 4
      %s37 = int_to_ptr.vmem [resolvable:$true] %s36
      %42 = dma.hbm_to_vmem [thread:$0]  %s1, 512, %s37, [#allocation6], 128, 128, 8
    $region9: #{tpu_custom_call.1} parent=1 // pred_fallthru
      _
    // Predicated region
    $region10: #{tpu_custom_call.1} parent=1 // pred_check
      _
    $region11: #{tpu_custom_call.1} parent=1 // pred_check_branch
      %44 = sbr.rel (0) target = $region13
    $region12: #{tpu_custom_call.1} parent=1 // pred_region
      %s46 = ssub.s32 2048, 2048
      %47 = vsyncadd [#allocation6], %s46
      %s48 = sshll.u32 [#allocation7], 4
      %s49 = int_to_ptr.vmem [resolvable:$true] %s48
      %54 = dma.hbm_to_vmem [thread:$0]  %s2, 2048, %s49, [#allocation6], 128, 128, 8
    $region13: #{tpu_custom_call.1} parent=1 // pred_fallthru
      _
    // Predicated region
    $region14: #{tpu_custom_call.1} parent=1 // pred_check
      _
    $region15: #{tpu_custom_call.1} parent=1 // pred_check_branch
      %56 = sbr.rel (0) target = $region17
    $region16: #{tpu_custom_call.1} parent=1 // pred_region
      %s58 = ssub.s32 8192, 8192
      %59 = vsyncadd [#allocation9], %s58
      %s60 = sshll.u32 [#allocation8], 4
      %s61 = int_to_ptr.vmem [resolvable:$true] %s60
      %66 = dma.hbm_to_vmem [thread:$0]  %s3, 8192, %s61, [#allocation9], 128, 128, 8
    $region17: #{tpu_custom_call.1} parent=1 // pred_fallthru
      _
    // Predicated region
    $region18: #{tpu_custom_call.1} parent=1 // pred_check
      _
    $region19: #{tpu_custom_call.1} parent=1 // pred_check_branch
      %68 = sbr.rel (0) target = $region21
    $region20: #{tpu_custom_call.1} parent=1 // pred_region
      %s70 = ssub.s32 8192, 8192
      %71 = vsyncadd [#allocation9], %s70
      %s72 = sshll.u32 [#allocation10], 4
      %s73 = int_to_ptr.vmem [resolvable:$true] %s72
      %78 = dma.hbm_to_vmem [thread:$0]  %s4, 8192, %s73, [#allocation9], 128, 128, 8
    $region21: #{tpu_custom_call.1} parent=1 // pred_fallthru
      _
    // Predicated region
    $region22: #{tpu_custom_call.1} parent=1 // pred_check
      _
    $region23: #{tpu_custom_call.1} parent=1 // pred_check_branch
      %80 = sbr.rel (0) target = $region25
    $region24: #{tpu_custom_call.1} parent=1 // pred_region
      %s82 = ssub.s32 8192, 8192
      %83 = vsyncadd [#allocation12], %s82
      %s84 = sshll.u32 [#allocation11], 4
      %s85 = int_to_ptr.vmem [resolvable:$true] %s84
      %90 = dma.hbm_to_vmem [thread:$0]  %s5, 8192, %s85, [#allocation12], 128, 128, 8
    $region25: #{tpu_custom_call.1} parent=1 // pred_fallthru
      _
    // Predicated region
    $region26: #{tpu_custom_call.1} parent=1 // pred_check
      _
    $region27: #{tpu_custom_call.1} parent=1 // pred_check_branch
      %92 = sbr.rel (0) target = $region29
    $region28: #{tpu_custom_call.1} parent=1 // pred_region
      _
    $region29: #{tpu_custom_call.1} parent=1 // pred_fallthru
      _
    // Predicated region
    $region30: #{tpu_custom_call.1} parent=1 // pred_check
      _
    $region31: #{tpu_custom_call.1} parent=1 // pred_check_branch
      %94 = sbr.rel (0) target = $region33
    $region32: #{tpu_custom_call.1} parent=1 // pred_region
      %s96 = ssub.s32 2048, 2048
      %97 = vsyncadd [#allocation12], %s96
      %s98 = sshll.u32 [#allocation13], 4
      %s99 = int_to_ptr.vmem [resolvable:$true] %s98
      %104 = dma.hbm_to_vmem [thread:$0]  %s7, 2048, %s99, [#allocation12], 128, 128, 8
    $region33: #{tpu_custom_call.1} parent=1 // pred_fallthru
      _
    // Predicated region
    $region34: #{tpu_custom_call.1} parent=1 // pred_check
      _
    $region35: #{tpu_custom_call.1} parent=1 // pred_check_branch
      %106 = sbr.rel (0) target = $region37
    $region36: #{tpu_custom_call.1} parent=1 // pred_region
      _
    $region37: #{tpu_custom_call.1} parent=1 // pred_fallthru
      _
    // Predicated region
    $region38: #{tpu_custom_call.1} parent=1 // pred_check
      _
    $region39: #{tpu_custom_call.1} parent=1 // pred_check_branch
      %108 = sbr.rel (0) target = $region41
    $region40: #{tpu_custom_call.1} parent=1 // pred_region
      %109 = dma.done [#allocation3], 512
    $region41: #{tpu_custom_call.1} parent=1 // pred_fallthru
      _
    // Predicated region
    $region42: #{tpu_custom_call.1} parent=1 // pred_check
      _
    $region43: #{tpu_custom_call.1} parent=1 // pred_check_branch
      %111 = sbr.rel (0) target = $region45
    $region44: #{tpu_custom_call.1} parent=1 // pred_region
      %112 = dma.done [#allocation6], 512
    $region45: #{tpu_custom_call.1} parent=1 // pred_fallthru
      _
    // Predicated region
    $region46: #{tpu_custom_call.1} parent=1 // pred_check
      _
    $region47: #{tpu_custom_call.1} parent=1 // pred_check_branch
      %114 = sbr.rel (0) target = $region49
    $region48: #{tpu_custom_call.1} parent=1 // pred_region
      %115 = dma.done [#allocation6], 2048
    $region49: #{tpu_custom_call.1} parent=1 // pred_fallthru
      _
    // Predicated region
    $region50: #{tpu_custom_call.1} parent=1 // pred_check
      _
    $region51: #{tpu_custom_call.1} parent=1 // pred_check_branch
      %117 = sbr.rel (0) target = $region53
    $region52: #{tpu_custom_call.1} parent=1 // pred_region
      %118 = dma.done [#allocation9], 8192
    $region53: #{tpu_custom_call.1} parent=1 // pred_fallthru
      _
    // Predicated region
    $region54: #{tpu_custom_call.1} parent=1 // pred_check
      _
    $region55: #{tpu_custom_call.1} parent=1 // pred_check_branch
      %120 = sbr.rel (0) target = $region57
    $region56: #{tpu_custom_call.1} parent=1 // pred_region
      %121 = dma.done [#allocation9], 8192
    $region57: #{tpu_custom_call.1} parent=1 // pred_fallthru
      _
    // Predicated region
    $region58: #{tpu_custom_call.1} parent=1 // pred_check
      _
    $region59: #{tpu_custom_call.1} parent=1 // pred_check_branch
      %123 = sbr.rel (0) target = $region61
    $region60: #{tpu_custom_call.1} parent=1 // pred_region
      %124 = dma.done [#allocation12], 8192
    $region61: #{tpu_custom_call.1} parent=1 // pred_fallthru
      _
    // Predicated region
    $region62: #{tpu_custom_call.1} parent=1 // pred_check
      _
    $region63: #{tpu_custom_call.1} parent=1 // pred_check_branch
      %126 = sbr.rel (0) target = $region65
    $region64: #{tpu_custom_call.1} parent=1 // pred_region
      %127 = dma.done [#allocation12], 2048
    $region65: #{tpu_custom_call.1} parent=1 // pred_fallthru
      _
    %v128 = vld [vmem:[#allocation7] sm:$0xff]
    %v129 = vld [vmem:[#allocation7 + $0x8] sm:$0xff]
    %v130 = vld [vmem:[#allocation7 + $0x10] sm:$0xff]
    %v131 = vld [vmem:[#allocation7 + $0x18] sm:$0xff]
    %v132 = vld [vmem:[#allocation7 + $0x20] sm:$0xff]
    %v133 = vld [vmem:[#allocation7 + $0x28] sm:$0xff]
    %v134 = vld [vmem:[#allocation7 + $0x30] sm:$0xff]
    %v135 = vld [vmem:[#allocation7 + $0x38] sm:$0xff]
    %v136 = vld [vmem:[#allocation7 + $0x40] sm:$0xff]
    %v137 = vld [vmem:[#allocation7 + $0x48] sm:$0xff]
    %v138 = vld [vmem:[#allocation7 + $0x50] sm:$0xff]
    %v139 = vld [vmem:[#allocation7 + $0x58] sm:$0xff]
    %v140 = vld [vmem:[#allocation7 + $0x60] sm:$0xff]
    %v141 = vld [vmem:[#allocation7 + $0x68] sm:$0xff]
    %v142 = vld [vmem:[#allocation7 + $0x70] sm:$0xff]
    %v143 = vld [vmem:[#allocation7 + $0x78] sm:$0xff]
    %v144 = vld [vmem:[#allocation2] sm:$0xff]
    %v145 = vld [vmem:[#allocation5] sm:$0xff]
    %v146 = vmul.f32 %v144, %v144
    %147 = vmatprep.subr.mxu0 0.0
    %148 = vmatpush1.msra.mxu0 %v143
    %149 = vmatprep.subr.mxu0 0.0
    %150 = vmatpush1.msra.mxu0 %v142
    %151 = vmatprep.subr.mxu0 0.0
    %152 = vmatpush1.msra.mxu0 %v141
    %153 = vmatprep.subr.mxu0 0.0
    %154 = vmatpush1.msra.mxu0 %v140
    %155 = vmatprep.subr.mxu0 0.0
    %156 = vmatpush1.msra.mxu0 %v139
    %157 = vmatprep.subr.mxu0 0.0
    %158 = vmatpush1.msra.mxu0 %v138
    %159 = vmatprep.subr.mxu0 0.0
    %160 = vmatpush1.msra.mxu0 %v137
    %161 = vmatprep.subr.mxu0 0.0
    %162 = vmatpush1.msra.mxu0 %v136
    %163 = vmatprep.subr.mxu0 0.0
    %164 = vmatpush1.msra.mxu0 %v135
    %165 = vmatprep.subr.mxu0 0.0
    %166 = vmatpush1.msra.mxu0 %v134
    %167 = vmatprep.subr.mxu0 0.0
    %168 = vmatpush1.msra.mxu0 %v133
    %169 = vmatprep.subr.mxu0 0.0
    %170 = vmatpush1.msra.mxu0 %v132
    %171 = vmatprep.subr.mxu0 0.0
    %172 = vmatpush1.msra.mxu0 %v131
    %173 = vmatprep.subr.mxu0 0.0
    %174 = vmatpush1.msra.mxu0 %v130
    %175 = vmatprep.subr.mxu0 0.0
    %176 = vmatpush1.msra.mxu0 %v129
    %177 = vmatprep.subr.mxu0 0.0
    %178 = vmatpush1.msra.mxu0 %v128
    %179 = vmatprep.subr.mxu0 0.0
    %180 = vmatpush2.msra.mxu0 0.0
    %181 = vmatprep.subr.mxu0 0.0
    %182 = vmatpush2.msra.mxu0 0.0
    %183 = vmatprep.subr.mxu0 0.0
    %184 = vmatpush2.msra.mxu0 0.0
    %185 = vmatprep.subr.mxu0 0.0
    %186 = vmatpush2.msra.mxu0 0.0
    %187 = vmatprep.subr.mxu0 0.0
    %188 = vmatpush2.msra.mxu0 0.0
    %189 = vmatprep.subr.mxu0 0.0
    %190 = vmatpush2.msra.mxu0 0.0
    %191 = vmatprep.subr.mxu0 0.0
    %192 = vmatpush2.msra.mxu0 0.0
    %193 = vmatprep.subr.mxu0 0.0
    %194 = vmatpush2.msra.mxu0 0.0
    %195 = vmatprep.subr.mxu0 0.0
    %196 = vmatpush2.msra.mxu0 0.0
    %197 = vmatprep.subr.mxu0 0.0
    %198 = vmatpush2.msra.mxu0 0.0
    %199 = vmatprep.subr.mxu0 0.0
    %200 = vmatpush2.msra.mxu0 0.0
    %201 = vmatprep.subr.mxu0 0.0
    %202 = vmatpush2.msra.mxu0 0.0
    %203 = vmatprep.subr.mxu0 0.0
    %204 = vmatpush2.msra.mxu0 0.0
    %205 = vmatprep.subr.mxu0 0.0
    %206 = vmatpush2.msra.mxu0 0.0
    %207 = vmatprep.subr.mxu0 0.0
    %208 = vmatpush2.msra.mxu0 0.0
    %209 = vmatprep.subr.mxu0 0.0
    %210 = vmatpush2.msra.mxu0 0.0
    %211 = vmatprep.mubr.f32.mxu0 0.0
    %212 = vmatmul.mubr.f32.gmra.mxu0 %v146
    %v213 = vpop.f32.mrf.mxu0
    %v214 = vadd.f32 0.0, %v213
    %v215 = vpop.f32.mrf.mxu0
    %216 = vdwg.mxu0
    %217 = vmax.xlane.f32.xlu0 %v214
    %v218 = vpop.xlane.xlu0 %217
    %v219 = vmax.f32 %v218, 1e-30
    %v220 = vrsqrt.pop %v219
    %v221 = vld [vmem:[#allocation8] sm:$0xff]
    %v222 = vld [vmem:[#allocation8 + $0x8] sm:$0xff]
    %v223 = vld [vmem:[#allocation8 + $0x10] sm:$0xff]
    %v224 = vld [vmem:[#allocation8 + $0x18] sm:$0xff]
    %v225 = vld [vmem:[#allocation8 + $0x20] sm:$0xff]
    %v226 = vld [vmem:[#allocation8 + $0x28] sm:$0xff]
    %v227 = vld [vmem:[#allocation8 + $0x30] sm:$0xff]
    %v228 = vld [vmem:[#allocation8 + $0x38] sm:$0xff]
    %v229 = vld [vmem:[#allocation8 + $0x40] sm:$0xff]
    %v230 = vld [vmem:[#allocation8 + $0x48] sm:$0xff]
    %v231 = vld [vmem:[#allocation8 + $0x50] sm:$0xff]
    %v232 = vld [vmem:[#allocation8 + $0x58] sm:$0xff]
    %v233 = vld [vmem:[#allocation8 + $0x60] sm:$0xff]
    %v234 = vld [vmem:[#allocation8 + $0x68] sm:$0xff]
    %v235 = vld [vmem:[#allocation8 + $0x70] sm:$0xff]
    %v236 = vld [vmem:[#allocation8 + $0x78] sm:$0xff]
    %v237 = vmul.f32 %v145, %v220
    %v238 = vld [vmem:[#allocation10] sm:$0xff]
    %v239 = vld [vmem:[#allocation10 + $0x8] sm:$0xff]
    %v240 = vld [vmem:[#allocation10 + $0x10] sm:$0xff]
    %v241 = vld [vmem:[#allocation10 + $0x18] sm:$0xff]
    %v242 = vld [vmem:[#allocation10 + $0x20] sm:$0xff]
    %v243 = vld [vmem:[#allocation10 + $0x28] sm:$0xff]
    %v244 = vld [vmem:[#allocation10 + $0x30] sm:$0xff]
    %v245 = vld [vmem:[#allocation10 + $0x38] sm:$0xff]
    %v246 = vld [vmem:[#allocation10 + $0x40] sm:$0xff]
    %v247 = vld [vmem:[#allocation10 + $0x48] sm:$0xff]
    %v248 = vld [vmem:[#allocation10 + $0x50] sm:$0xff]
    %v249 = vld [vmem:[#allocation10 + $0x58] sm:$0xff]
    %v250 = vld [vmem:[#allocation10 + $0x60] sm:$0xff]
    %v251 = vld [vmem:[#allocation10 + $0x68] sm:$0xff]
    %v252 = vld [vmem:[#allocation10 + $0x70] sm:$0xff]
    %v253 = vld [vmem:[#allocation10 + $0x78] sm:$0xff]
    %254 = vmatprep.subr.mxu0 0.0
    %255 = vmatpush1.msra.mxu0 %v253
    %256 = vmatprep.subr.mxu0 0.0
    %257 = vmatpush1.msra.mxu0 %v252
    %258 = vmatprep.subr.mxu0 0.0
    %259 = vmatpush1.msra.mxu0 %v251
    %260 = vmatprep.subr.mxu0 0.0
    %261 = vmatpush1.msra.mxu0 %v250
    %262 = vmatprep.subr.mxu0 0.0
    %263 = vmatpush1.msra.mxu0 %v249
    %264 = vmatprep.subr.mxu0 0.0
    %265 = vmatpush1.msra.mxu0 %v248
    %266 = vmatprep.subr.mxu0 0.0
    %267 = vmatpush1.msra.mxu0 %v247
    %268 = vmatprep.subr.mxu0 0.0
    %269 = vmatpush1.msra.mxu0 %v246
    %270 = vmatprep.subr.mxu0 0.0
    %271 = vmatpush1.msra.mxu0 %v245
    %272 = vmatprep.subr.mxu0 0.0
    %273 = vmatpush1.msra.mxu0 %v244
    %274 = vmatprep.subr.mxu0 0.0
    %275 = vmatpush1.msra.mxu0 %v243
    %276 = vmatprep.subr.mxu0 0.0
    %277 = vmatpush1.msra.mxu0 %v242
    %278 = vmatprep.subr.mxu0 0.0
    %279 = vmatpush1.msra.mxu0 %v241
    %280 = vmatprep.subr.mxu0 0.0
    %281 = vmatpush1.msra.mxu0 %v240
    %282 = vmatprep.subr.mxu0 0.0
    %283 = vmatpush1.msra.mxu0 %v239
    %284 = vmatprep.subr.mxu0 0.0
    %285 = vmatpush1.msra.mxu0 %v238
    %286 = vmatprep.subr.mxu0 0.0
    %287 = vmatpush2.msra.mxu0 0.0
    %288 = vmatprep.subr.mxu0 0.0
    %289 = vmatpush2.msra.mxu0 0.0
    %290 = vmatprep.subr.mxu0 0.0
    %291 = vmatpush2.msra.mxu0 0.0
    %292 = vmatprep.subr.mxu0 0.0
    %293 = vmatpush2.msra.mxu0 0.0
    %294 = vmatprep.subr.mxu0 0.0
    %295 = vmatpush2.msra.mxu0 0.0
    %296 = vmatprep.subr.mxu0 0.0
    %297 = vmatpush2.msra.mxu0 0.0
    %298 = vmatprep.subr.mxu0 0.0
    %299 = vmatpush2.msra.mxu0 0.0
    %300 = vmatprep.subr.mxu0 0.0
    %301 = vmatpush2.msra.mxu0 0.0
    %302 = vmatprep.subr.mxu0 0.0
    %303 = vmatpush2.msra.mxu0 0.0
    %304 = vmatprep.subr.mxu0 0.0
    %305 = vmatpush2.msra.mxu0 0.0
    %306 = vmatprep.subr.mxu0 0.0
    %307 = vmatpush2.msra.mxu0 0.0
    %308 = vmatprep.subr.mxu0 0.0
    %309 = vmatpush2.msra.mxu0 0.0
    %310 = vmatprep.subr.mxu0 0.0
    %311 = vmatpush2.msra.mxu0 0.0
    %312 = vmatprep.subr.mxu0 0.0
    %313 = vmatpush2.msra.mxu0 0.0
    %314 = vmatprep.subr.mxu0 0.0
    %315 = vmatpush2.msra.mxu0 0.0
    %316 = vmatprep.subr.mxu0 0.0
    %317 = vmatpush2.msra.mxu0 0.0
    %318 = vmatprep.mubr.f32.mxu0 0.0
    %319 = vmatmul.mubr.f32.gmra.mxu0 %v237
    %v320 = vpop.f32.mrf.mxu0
    %v321 = vadd.f32 0.0, %v320
    %v322 = vpop.f32.mrf.mxu0
    %323 = vdwg.mxu0
    %324 = vmatprep.subr.mxu0 0.0
    %325 = vmatpush1.msra.mxu0 %v236
    %326 = vmatprep.subr.mxu0 0.0
    %327 = vmatpush1.msra.mxu0 %v235
    %328 = vmatprep.subr.mxu0 0.0
    %329 = vmatpush1.msra.mxu0 %v234
    %330 = vmatprep.subr.mxu0 0.0
    %331 = vmatpush1.msra.mxu0 %v233
    %332 = vmatprep.subr.mxu0 0.0
    %333 = vmatpush1.msra.mxu0 %v232
    %334 = vmatprep.subr.mxu0 0.0
    %335 = vmatpush1.msra.mxu0 %v231
    %336 = vmatprep.subr.mxu0 0.0
    %337 = vmatpush1.msra.mxu0 %v230
    %338 = vmatprep.subr.mxu0 0.0
    %339 = vmatpush1.msra.mxu0 %v229
    %340 = vmatprep.subr.mxu0 0.0
    %341 = vmatpush1.msra.mxu0 %v228
    %342 = vmatprep.subr.mxu0 0.0
    %343 = vmatpush1.msra.mxu0 %v227
    %344 = vmatprep.subr.mxu0 0.0
    %345 = vmatpush1.msra.mxu0 %v226
    %346 = vmatprep.subr.mxu0 0.0
    %347 = vmatpush1.msra.mxu0 %v225
    %348 = vmatprep.subr.mxu0 0.0
    %349 = vmatpush1.msra.mxu0 %v224
    %350 = vmatprep.subr.mxu0 0.0
    %351 = vmatpush1.msra.mxu0 %v223
    %352 = vmatprep.subr.mxu0 0.0
    %353 = vmatpush1.msra.mxu0 %v222
    %354 = vmatprep.subr.mxu0 0.0
    %355 = vmatpush1.msra.mxu0 %v221
    %356 = vmatprep.subr.mxu0 0.0
    %357 = vmatpush2.msra.mxu0 0.0
    %358 = vmatprep.subr.mxu0 0.0
    %359 = vmatpush2.msra.mxu0 0.0
    %360 = vmatprep.subr.mxu0 0.0
    %361 = vmatpush2.msra.mxu0 0.0
    %362 = vmatprep.subr.mxu0 0.0
    %363 = vmatpush2.msra.mxu0 0.0
    %364 = vmatprep.subr.mxu0 0.0
    %365 = vmatpush2.msra.mxu0 0.0
    %366 = vmatprep.subr.mxu0 0.0
    %367 = vmatpush2.msra.mxu0 0.0
    %368 = vmatprep.subr.mxu0 0.0
    %369 = vmatpush2.msra.mxu0 0.0
    %370 = vmatprep.subr.mxu0 0.0
    %371 = vmatpush2.msra.mxu0 0.0
    %372 = vmatprep.subr.mxu0 0.0
    %373 = vmatpush2.msra.mxu0 0.0
    %374 = vmatprep.subr.mxu0 0.0
    %375 = vmatpush2.msra.mxu0 0.0
    %376 = vmatprep.subr.mxu0 0.0
    %377 = vmatpush2.msra.mxu0 0.0
    %378 = vmatprep.subr.mxu0 0.0
    %379 = vmatpush2.msra.mxu0 0.0
    %380 = vmatprep.subr.mxu0 0.0
    %381 = vmatpush2.msra.mxu0 0.0
    %382 = vmatprep.subr.mxu0 0.0
    %383 = vmatpush2.msra.mxu0 0.0
    %384 = vmatprep.subr.mxu0 0.0
    %385 = vmatpush2.msra.mxu0 0.0
    %386 = vmatprep.subr.mxu0 0.0
    %387 = vmatpush2.msra.mxu0 0.0
    %388 = vmatprep.mubr.f32.mxu0 0.0
    %389 = vmatmul.mubr.f32.gmra.mxu0 %v144
    %v390 = vpop.f32.mrf.mxu0
    %v391 = vadd.f32 %v321, %v390
    %v392 = vpop.f32.mrf.mxu0
    %393 = vdwg.mxu0
    %vm394 = vcmp.gt.f32.partialorder %v391, 0.0
    %v395 = vmul.f32 %v391, 0.05
    %v396 = vsel %vm394, %v391, %v395
    %v397 = vld [vmem:[#allocation11] sm:$0xff]
    %v398 = vld [vmem:[#allocation11 + $0x8] sm:$0xff]
    %v399 = vld [vmem:[#allocation11 + $0x10] sm:$0xff]
    %v400 = vld [vmem:[#allocation11 + $0x18] sm:$0xff]
    %v401 = vld [vmem:[#allocation11 + $0x20] sm:$0xff]
    %v402 = vld [vmem:[#allocation11 + $0x28] sm:$0xff]
    %v403 = vld [vmem:[#allocation11 + $0x30] sm:$0xff]
    %v404 = vld [vmem:[#allocation11 + $0x38] sm:$0xff]
    %v405 = vld [vmem:[#allocation11 + $0x40] sm:$0xff]
    %v406 = vld [vmem:[#allocation11 + $0x48] sm:$0xff]
    %v407 = vld [vmem:[#allocation11 + $0x50] sm:$0xff]
    %v408 = vld [vmem:[#allocation11 + $0x58] sm:$0xff]
    %v409 = vld [vmem:[#allocation11 + $0x60] sm:$0xff]
    %v410 = vld [vmem:[#allocation11 + $0x68] sm:$0xff]
    %v411 = vld [vmem:[#allocation11 + $0x70] sm:$0xff]
    %v412 = vld [vmem:[#allocation11 + $0x78] sm:$0xff]
    %s413 = scalar_lea.vmem [#allocation2], 8
    %v414 = vld [vmem:[%s413] sm:$0xff]
    %s415 = scalar_lea.vmem [#allocation5], 8
    %v416 = vld [vmem:[%s415] sm:$0xff]
    %v417 = vmul.f32 %v414, %v414
    %418 = vmatprep.subr.mxu0 0.0
    %419 = vmatpush1.msra.mxu0 %v143
    %420 = vmatprep.subr.mxu0 0.0
    %421 = vmatpush1.msra.mxu0 %v142
    %422 = vmatprep.subr.mxu0 0.0
    %423 = vmatpush1.msra.mxu0 %v141
    %424 = vmatprep.subr.mxu0 0.0
    %425 = vmatpush1.msra.mxu0 %v140
    %426 = vmatprep.subr.mxu0 0.0
    %427 = vmatpush1.msra.mxu0 %v139
    %428 = vmatprep.subr.mxu0 0.0
    %429 = vmatpush1.msra.mxu0 %v138
    %430 = vmatprep.subr.mxu0 0.0
    %431 = vmatpush1.msra.mxu0 %v137
    %432 = vmatprep.subr.mxu0 0.0
    %433 = vmatpush1.msra.mxu0 %v136
    %434 = vmatprep.subr.mxu0 0.0
    %435 = vmatpush1.msra.mxu0 %v135
    %436 = vmatprep.subr.mxu0 0.0
    %437 = vmatpush1.msra.mxu0 %v134
    %438 = vmatprep.subr.mxu0 0.0
    %439 = vmatpush1.msra.mxu0 %v133
    %440 = vmatprep.subr.mxu0 0.0
    %441 = vmatpush1.msra.mxu0 %v132
    %442 = vmatprep.subr.mxu0 0.0
    %443 = vmatpush1.msra.mxu0 %v131
    %444 = vmatprep.subr.mxu0 0.0
    %445 = vmatpush1.msra.mxu0 %v130
    %446 = vmatprep.subr.mxu0 0.0
    %447 = vmatpush1.msra.mxu0 %v129
    %448 = vmatprep.subr.mxu0 0.0
    %449 = vmatpush1.msra.mxu0 %v128
    %450 = vmatprep.subr.mxu0 0.0
    %451 = vmatpush2.msra.mxu0 0.0
    %452 = vmatprep.subr.mxu0 0.0
    %453 = vmatpush2.msra.mxu0 0.0
    %454 = vmatprep.subr.mxu0 0.0
    %455 = vmatpush2.msra.mxu0 0.0
    %456 = vmatprep.subr.mxu0 0.0
    %457 = vmatpush2.msra.mxu0 0.0
    %458 = vmatprep.subr.mxu0 0.0
    %459 = vmatpush2.msra.mxu0 0.0
    %460 = vmatprep.subr.mxu0 0.0
    %461 = vmatpush2.msra.mxu0 0.0
    %462 = vmatprep.subr.mxu0 0.0
    %463 = vmatpush2.msra.mxu0 0.0
    %464 = vmatprep.subr.mxu0 0.0
    %465 = vmatpush2.msra.mxu0 0.0
    %466 = vmatprep.subr.mxu0 0.0
    %467 = vmatpush2.msra.mxu0 0.0
    %468 = vmatprep.subr.mxu0 0.0
    %469 = vmatpush2.msra.mxu0 0.0
    %470 = vmatprep.subr.mxu0 0.0
    %471 = vmatpush2.msra.mxu0 0.0
    %472 = vmatprep.subr.mxu0 0.0
    %473 = vmatpush2.msra.mxu0 0.0
    %474 = vmatprep.subr.mxu0 0.0
    %475 = vmatpush2.msra.mxu0 0.0
    %476 = vmatprep.subr.mxu0 0.0
    %477 = vmatpush2.msra.mxu0 0.0
    %478 = vmatprep.subr.mxu0 0.0
    %479 = vmatpush2.msra.mxu0 0.0
    %480 = vmatprep.subr.mxu0 0.0
    %481 = vmatpush2.msra.mxu0 0.0
    %482 = vmatprep.mubr.f32.mxu0 0.0
    %483 = vmatmul.mubr.f32.gmra.mxu0 %v417
    %v484 = vpop.f32.mrf.mxu0
    %v485 = vadd.f32 0.0, %v484
    %v486 = vpop.f32.mrf.mxu0
    %487 = vdwg.mxu0
    %488 = vmax.xlane.f32.xlu0 %v485
    %v489 = vpop.xlane.xlu0 %488
    %v490 = vmax.f32 %v489, 1e-30
    %v491 = vrsqrt.pop %v490
    %s492 = scalar_lea.vmem [#allocation8], 128
    %v493 = vld [vmem:[%s492] sm:$0xff]
    %v494 = vld [vmem:[%s492 + $0x8] sm:$0xff]
    %v495 = vld [vmem:[%s492 + $0x10] sm:$0xff]
    %v496 = vld [vmem:[%s492 + $0x18] sm:$0xff]
    %v497 = vld [vmem:[%s492 + $0x20] sm:$0xff]
    %v498 = vld [vmem:[%s492 + $0x28] sm:$0xff]
    %v499 = vld [vmem:[%s492 + $0x30] sm:$0xff]
    %v500 = vld [vmem:[%s492 + $0x38] sm:$0xff]
    %v501 = vld [vmem:[%s492 + $0x40] sm:$0xff]
    %v502 = vld [vmem:[%s492 + $0x48] sm:$0xff]
    %v503 = vld [vmem:[%s492 + $0x50] sm:$0xff]
    %v504 = vld [vmem:[%s492 + $0x58] sm:$0xff]
    %v505 = vld [vmem:[%s492 + $0x60] sm:$0xff]
    %v506 = vld [vmem:[%s492 + $0x68] sm:$0xff]
    %v507 = vld [vmem:[%s492 + $0x70] sm:$0xff]
    %v508 = vld [vmem:[%s492 + $0x78] sm:$0xff]
    %v509 = vmul.f32 %v416, %v491
    %s510 = scalar_lea.vmem [#allocation10], 128
    %v511 = vld [vmem:[%s510] sm:$0xff]
    %v512 = vld [vmem:[%s510 + $0x8] sm:$0xff]
    %v513 = vld [vmem:[%s510 + $0x10] sm:$0xff]
    %v514 = vld [vmem:[%s510 + $0x18] sm:$0xff]
    %v515 = vld [vmem:[%s510 + $0x20] sm:$0xff]
    %v516 = vld [vmem:[%s510 + $0x28] sm:$0xff]
    %v517 = vld [vmem:[%s510 + $0x30] sm:$0xff]
    %v518 = vld [vmem:[%s510 + $0x38] sm:$0xff]
    %v519 = vld [vmem:[%s510 + $0x40] sm:$0xff]
    %v520 = vld [vmem:[%s510 + $0x48] sm:$0xff]
    %v521 = vld [vmem:[%s510 + $0x50] sm:$0xff]
    %v522 = vld [vmem:[%s510 + $0x58] sm:$0xff]
    %v523 = vld [vmem:[%s510 + $0x60] sm:$0xff]
    %v524 = vld [vmem:[%s510 + $0x68] sm:$0xff]
    %v525 = vld [vmem:[%s510 + $0x70] sm:$0xff]
    %v526 = vld [vmem:[%s510 + $0x78] sm:$0xff]
    %527 = vmatprep.subr.mxu0 0.0
    %528 = vmatpush1.msra.mxu0 %v526
    %529 = vmatprep.subr.mxu0 0.0
    %530 = vmatpush1.msra.mxu0 %v525
    %531 = vmatprep.subr.mxu0 0.0
    %532 = vmatpush1.msra.mxu0 %v524
    %533 = vmatprep.subr.mxu0 0.0
    %534 = vmatpush1.msra.mxu0 %v523
    %535 = vmatprep.subr.mxu0 0.0
    %536 = vmatpush1.msra.mxu0 %v522
    %537 = vmatprep.subr.mxu0 0.0
    %538 = vmatpush1.msra.mxu0 %v521
    %539 = vmatprep.subr.mxu0 0.0
    %540 = vmatpush1.msra.mxu0 %v520
    %541 = vmatprep.subr.mxu0 0.0
    %542 = vmatpush1.msra.mxu0 %v519
    %543 = vmatprep.subr.mxu0 0.0
    %544 = vmatpush1.msra.mxu0 %v518
    %545 = vmatprep.subr.mxu0 0.0
    %546 = vmatpush1.msra.mxu0 %v517
    %547 = vmatprep.subr.mxu0 0.0
    %548 = vmatpush1.msra.mxu0 %v516
    %549 = vmatprep.subr.mxu0 0.0
    %550 = vmatpush1.msra.mxu0 %v515
    %551 = vmatprep.subr.mxu0 0.0
    %552 = vmatpush1.msra.mxu0 %v514
    %553 = vmatprep.subr.mxu0 0.0
    %554 = vmatpush1.msra.mxu0 %v513
    %555 = vmatprep.subr.mxu0 0.0
    %556 = vmatpush1.msra.mxu0 %v512
    %557 = vmatprep.subr.mxu0 0.0
    %558 = vmatpush1.msra.mxu0 %v511
    %559 = vmatprep.subr.mxu0 0.0
    %560 = vmatpush2.msra.mxu0 0.0
    %561 = vmatprep.subr.mxu0 0.0
    %562 = vmatpush2.msra.mxu0 0.0
    %563 = vmatprep.subr.mxu0 0.0
    %564 = vmatpush2.msra.mxu0 0.0
    %565 = vmatprep.subr.mxu0 0.0
    %566 = vmatpush2.msra.mxu0 0.0
    %567 = vmatprep.subr.mxu0 0.0
    %568 = vmatpush2.msra.mxu0 0.0
    %569 = vmatprep.subr.mxu0 0.0
    %570 = vmatpush2.msra.mxu0 0.0
    %571 = vmatprep.subr.mxu0 0.0
    %572 = vmatpush2.msra.mxu0 0.0
    %573 = vmatprep.subr.mxu0 0.0
    %574 = vmatpush2.msra.mxu0 0.0
    %575 = vmatprep.subr.mxu0 0.0
    %576 = vmatpush2.msra.mxu0 0.0
    %577 = vmatprep.subr.mxu0 0.0
    %578 = vmatpush2.msra.mxu0 0.0
    %579 = vmatprep.subr.mxu0 0.0
    %580 = vmatpush2.msra.mxu0 0.0
    %581 = vmatprep.subr.mxu0 0.0
    %582 = vmatpush2.msra.mxu0 0.0
    %583 = vmatprep.subr.mxu0 0.0
    %584 = vmatpush2.msra.mxu0 0.0
    %585 = vmatprep.subr.mxu0 0.0
    %586 = vmatpush2.msra.mxu0 0.0
    %587 = vmatprep.subr.mxu0 0.0
    %588 = vmatpush2.msra.mxu0 0.0
    %589 = vmatprep.subr.mxu0 0.0
    %590 = vmatpush2.msra.mxu0 0.0
    %591 = vmatprep.mubr.f32.mxu0 0.0
    %592 = vmatmul.mubr.f32.gmra.mxu0 %v509
    %v593 = vpop.f32.mrf.mxu0
    %v594 = vadd.f32 0.0, %v593
    %v595 = vpop.f32.mrf.mxu0
    %596 = vdwg.mxu0
    %597 = vmatprep.subr.mxu0 0.0
    %598 = vmatpush1.msra.mxu0 %v508
    %599 = vmatprep.subr.mxu0 0.0
    %600 = vmatpush1.msra.mxu0 %v507
    %601 = vmatprep.subr.mxu0 0.0
    %602 = vmatpush1.msra.mxu0 %v506
    %603 = vmatprep.subr.mxu0 0.0
    %604 = vmatpush1.msra.mxu0 %v505
    %605 = vmatprep.subr.mxu0 0.0
    %606 = vmatpush1.msra.mxu0 %v504
    %607 = vmatprep.subr.mxu0 0.0
    %608 = vmatpush1.msra.mxu0 %v503
    %609 = vmatprep.subr.mxu0 0.0
    %610 = vmatpush1.msra.mxu0 %v502
    %611 = vmatprep.subr.mxu0 0.0
    %612 = vmatpush1.msra.mxu0 %v501
    %613 = vmatprep.subr.mxu0 0.0
    %614 = vmatpush1.msra.mxu0 %v500
    %615 = vmatprep.subr.mxu0 0.0
    %616 = vmatpush1.msra.mxu0 %v499
    %617 = vmatprep.subr.mxu0 0.0
    %618 = vmatpush1.msra.mxu0 %v498
    %619 = vmatprep.subr.mxu0 0.0
    %620 = vmatpush1.msra.mxu0 %v497
    %621 = vmatprep.subr.mxu0 0.0
    %622 = vmatpush1.msra.mxu0 %v496
    %623 = vmatprep.subr.mxu0 0.0
    %624 = vmatpush1.msra.mxu0 %v495
    %625 = vmatprep.subr.mxu0 0.0
    %626 = vmatpush1.msra.mxu0 %v494
    %627 = vmatprep.subr.mxu0 0.0
    %628 = vmatpush1.msra.mxu0 %v493
    %629 = vmatprep.subr.mxu0 0.0
    %630 = vmatpush2.msra.mxu0 0.0
    %631 = vmatprep.subr.mxu0 0.0
    %632 = vmatpush2.msra.mxu0 0.0
    %633 = vmatprep.subr.mxu0 0.0
    %634 = vmatpush2.msra.mxu0 0.0
    %635 = vmatprep.subr.mxu0 0.0
    %636 = vmatpush2.msra.mxu0 0.0
    %637 = vmatprep.subr.mxu0 0.0
    %638 = vmatpush2.msra.mxu0 0.0
    %639 = vmatprep.subr.mxu0 0.0
    %640 = vmatpush2.msra.mxu0 0.0
    %641 = vmatprep.subr.mxu0 0.0
    %642 = vmatpush2.msra.mxu0 0.0
    %643 = vmatprep.subr.mxu0 0.0
    %644 = vmatpush2.msra.mxu0 0.0
    %645 = vmatprep.subr.mxu0 0.0
    %646 = vmatpush2.msra.mxu0 0.0
    %647 = vmatprep.subr.mxu0 0.0
    %648 = vmatpush2.msra.mxu0 0.0
    %649 = vmatprep.subr.mxu0 0.0
    %650 = vmatpush2.msra.mxu0 0.0
    %651 = vmatprep.subr.mxu0 0.0
    %652 = vmatpush2.msra.mxu0 0.0
    %653 = vmatprep.subr.mxu0 0.0
    %654 = vmatpush2.msra.mxu0 0.0
    %655 = vmatprep.subr.mxu0 0.0
    %656 = vmatpush2.msra.mxu0 0.0
    %657 = vmatprep.subr.mxu0 0.0
    %658 = vmatpush2.msra.mxu0 0.0
    %659 = vmatprep.subr.mxu0 0.0
    %660 = vmatpush2.msra.mxu0 0.0
    %661 = vmatprep.mubr.f32.mxu0 0.0
    %662 = vmatmul.mubr.f32.gmra.mxu0 %v414
    %v663 = vpop.f32.mrf.mxu0
    %v664 = vadd.f32 %v594, %v663
    %v665 = vpop.f32.mrf.mxu0
    %666 = vdwg.mxu0
    %vm667 = vcmp.gt.f32.partialorder %v664, 0.0
    %v668 = vmul.f32 %v664, 0.05
    %v669 = vsel %vm667, %v664, %v668
    %s670 = scalar_lea.vmem [#allocation11], 128
    %v671 = vld [vmem:[%s670] sm:$0xff]
    %v672 = vld [vmem:[%s670 + $0x8] sm:$0xff]
    %v673 = vld [vmem:[%s670 + $0x10] sm:$0xff]
    %v674 = vld [vmem:[%s670 + $0x18] sm:$0xff]
    %v675 = vld [vmem:[%s670 + $0x20] sm:$0xff]
    %v676 = vld [vmem:[%s670 + $0x28] sm:$0xff]
    %v677 = vld [vmem:[%s670 + $0x30] sm:$0xff]
    %v678 = vld [vmem:[%s670 + $0x38] sm:$0xff]
    %v679 = vld [vmem:[%s670 + $0x40] sm:$0xff]
    %v680 = vld [vmem:[%s670 + $0x48] sm:$0xff]
    %v681 = vld [vmem:[%s670 + $0x50] sm:$0xff]
    %v682 = vld [vmem:[%s670 + $0x58] sm:$0xff]
    %v683 = vld [vmem:[%s670 + $0x60] sm:$0xff]
    %v684 = vld [vmem:[%s670 + $0x68] sm:$0xff]
    %v685 = vld [vmem:[%s670 + $0x70] sm:$0xff]
    %v686 = vld [vmem:[%s670 + $0x78] sm:$0xff]
    %687 = vmatprep.subr.mxu0 0.0
    %688 = vmatpush1.msra.mxu0 %v686
    %689 = vmatprep.subr.mxu0 0.0
    %690 = vmatpush1.msra.mxu0 %v685
    %691 = vmatprep.subr.mxu0 0.0
    %692 = vmatpush1.msra.mxu0 %v684
    %693 = vmatprep.subr.mxu0 0.0
    %694 = vmatpush1.msra.mxu0 %v683
    %695 = vmatprep.subr.mxu0 0.0
    %696 = vmatpush1.msra.mxu0 %v682
    %697 = vmatprep.subr.mxu0 0.0
    %698 = vmatpush1.msra.mxu0 %v681
    %699 = vmatprep.subr.mxu0 0.0
    %700 = vmatpush1.msra.mxu0 %v680
    %701 = vmatprep.subr.mxu0 0.0
    %702 = vmatpush1.msra.mxu0 %v679
    %703 = vmatprep.subr.mxu0 0.0
    %704 = vmatpush1.msra.mxu0 %v678
    %705 = vmatprep.subr.mxu0 0.0
    %706 = vmatpush1.msra.mxu0 %v677
    %707 = vmatprep.subr.mxu0 0.0
    %708 = vmatpush1.msra.mxu0 %v676
    %709 = vmatprep.subr.mxu0 0.0
    %710 = vmatpush1.msra.mxu0 %v675
    %711 = vmatprep.subr.mxu0 0.0
    %712 = vmatpush1.msra.mxu0 %v674
    %713 = vmatprep.subr.mxu0 0.0
    %714 = vmatpush1.msra.mxu0 %v673
    %715 = vmatprep.subr.mxu0 0.0
    %716 = vmatpush1.msra.mxu0 %v672
    %717 = vmatprep.subr.mxu0 0.0
    %718 = vmatpush1.msra.mxu0 %v671
    %719 = vmatprep.subr.mxu0 0.0
    %720 = vmatpush2.msra.mxu0 0.0
    %721 = vmatprep.subr.mxu0 0.0
    %722 = vmatpush2.msra.mxu0 0.0
    %723 = vmatprep.subr.mxu0 0.0
    %724 = vmatpush2.msra.mxu0 0.0
    %725 = vmatprep.subr.mxu0 0.0
    %726 = vmatpush2.msra.mxu0 0.0
    %727 = vmatprep.subr.mxu0 0.0
    %728 = vmatpush2.msra.mxu0 0.0
    %729 = vmatprep.subr.mxu0 0.0
    %730 = vmatpush2.msra.mxu0 0.0
    %731 = vmatprep.subr.mxu0 0.0
    %732 = vmatpush2.msra.mxu0 0.0
    %733 = vmatprep.subr.mxu0 0.0
    %734 = vmatpush2.msra.mxu0 0.0
    %735 = vmatprep.subr.mxu0 0.0
    %736 = vmatpush2.msra.mxu0 0.0
    %737 = vmatprep.subr.mxu0 0.0
    %738 = vmatpush2.msra.mxu0 0.0
    %739 = vmatprep.subr.mxu0 0.0
    %740 = vmatpush2.msra.mxu0 0.0
    %741 = vmatprep.subr.mxu0 0.0
    %742 = vmatpush2.msra.mxu0 0.0
    %743 = vmatprep.subr.mxu0 0.0
    %744 = vmatpush2.msra.mxu0 0.0
    %745 = vmatprep.subr.mxu0 0.0
    %746 = vmatpush2.msra.mxu0 0.0
    %747 = vmatprep.subr.mxu0 0.0
    %748 = vmatpush2.msra.mxu0 0.0
    %749 = vmatprep.subr.mxu0 0.0
    %750 = vmatpush2.msra.mxu0 0.0
    %751 = vmatprep.mubr.f32.mxu0 0.0
    %752 = vmatmul.mubr.f32.gmra.mxu0 %v669
    %v753 = vpop.f32.mrf.mxu0
    %v754 = vadd.f32 0.0, %v753
    %v755 = vpop.f32.mrf.mxu0
    %756 = vdwg.mxu0
    %757 = vmatprep.subr.mxu0 0.0
    %758 = vmatpush1.msra.mxu0 %v412
    %759 = vmatprep.subr.mxu0 0.0
    %760 = vmatpush1.msra.mxu0 %v411
    %761 = vmatprep.subr.mxu0 0.0
    %762 = vmatpush1.msra.mxu0 %v410
    %763 = vmatprep.subr.mxu0 0.0
    %764 = vmatpush1.msra.mxu0 %v409
    %765 = vmatprep.subr.mxu0 0.0
    %766 = vmatpush1.msra.mxu0 %v408
    %767 = vmatprep.subr.mxu0 0.0
    %768 = vmatpush1.msra.mxu0 %v407
    %769 = vmatprep.subr.mxu0 0.0
    %770 = vmatpush1.msra.mxu0 %v406
    %771 = vmatprep.subr.mxu0 0.0
    %772 = vmatpush1.msra.mxu0 %v405
    %773 = vmatprep.subr.mxu0 0.0
    %774 = vmatpush1.msra.mxu0 %v404
    %775 = vmatprep.subr.mxu0 0.0
    %776 = vmatpush1.msra.mxu0 %v403
    %777 = vmatprep.subr.mxu0 0.0
    %778 = vmatpush1.msra.mxu0 %v402
    %779 = vmatprep.subr.mxu0 0.0
    %780 = vmatpush1.msra.mxu0 %v401
    %781 = vmatprep.subr.mxu0 0.0
    %782 = vmatpush1.msra.mxu0 %v400
    %783 = vmatprep.subr.mxu0 0.0
    %784 = vmatpush1.msra.mxu0 %v399
    %785 = vmatprep.subr.mxu0 0.0
    %786 = vmatpush1.msra.mxu0 %v398
    %787 = vmatprep.subr.mxu0 0.0
    %788 = vmatpush1.msra.mxu0 %v397
    %789 = vmatprep.subr.mxu0 0.0
    %790 = vmatpush2.msra.mxu0 0.0
    %791 = vmatprep.subr.mxu0 0.0
    %792 = vmatpush2.msra.mxu0 0.0
    %793 = vmatprep.subr.mxu0 0.0
    %794 = vmatpush2.msra.mxu0 0.0
    %795 = vmatprep.subr.mxu0 0.0
    %796 = vmatpush2.msra.mxu0 0.0
    %797 = vmatprep.subr.mxu0 0.0
    %798 = vmatpush2.msra.mxu0 0.0
    %799 = vmatprep.subr.mxu0 0.0
    %800 = vmatpush2.msra.mxu0 0.0
    %801 = vmatprep.subr.mxu0 0.0
    %802 = vmatpush2.msra.mxu0 0.0
    %803 = vmatprep.subr.mxu0 0.0
    %804 = vmatpush2.msra.mxu0 0.0
    %805 = vmatprep.subr.mxu0 0.0
    %806 = vmatpush2.msra.mxu0 0.0
    %807 = vmatprep.subr.mxu0 0.0
    %808 = vmatpush2.msra.mxu0 0.0
    %809 = vmatprep.subr.mxu0 0.0
    %810 = vmatpush2.msra.mxu0 0.0
    %811 = vmatprep.subr.mxu0 0.0
    %812 = vmatpush2.msra.mxu0 0.0
    %813 = vmatprep.subr.mxu0 0.0
    %814 = vmatpush2.msra.mxu0 0.0
    %815 = vmatprep.subr.mxu0 0.0
    %816 = vmatpush2.msra.mxu0 0.0
    %817 = vmatprep.subr.mxu0 0.0
    %818 = vmatpush2.msra.mxu0 0.0
    %819 = vmatprep.subr.mxu0 0.0
    %820 = vmatpush2.msra.mxu0 0.0
    %821 = vmatprep.mubr.f32.mxu0 0.0
    %822 = vmatmul.mubr.f32.gmra.mxu0 %v396
    %v823 = vpop.f32.mrf.mxu0
    %v824 = vadd.f32 %v754, %v823
    %v825 = vpop.f32.mrf.mxu0
    %826 = vdwg.mxu0
    %s827 = scalar_lea.vmem [#allocation2], 16
    %v828 = vld [vmem:[%s827] sm:$0xff]
    %s829 = scalar_lea.vmem [#allocation5], 16
    %v830 = vld [vmem:[%s829] sm:$0xff]
    %v831 = vmul.f32 %v828, %v828
    %832 = vmatprep.subr.mxu0 0.0
    %833 = vmatpush1.msra.mxu0 %v143
    %834 = vmatprep.subr.mxu0 0.0
    %835 = vmatpush1.msra.mxu0 %v142
    %836 = vmatprep.subr.mxu0 0.0
    %837 = vmatpush1.msra.mxu0 %v141
    %838 = vmatprep.subr.mxu0 0.0
    %839 = vmatpush1.msra.mxu0 %v140
    %840 = vmatprep.subr.mxu0 0.0
    %841 = vmatpush1.msra.mxu0 %v139
    %842 = vmatprep.subr.mxu0 0.0
    %843 = vmatpush1.msra.mxu0 %v138
    %844 = vmatprep.subr.mxu0 0.0
    %845 = vmatpush1.msra.mxu0 %v137
    %846 = vmatprep.subr.mxu0 0.0
    %847 = vmatpush1.msra.mxu0 %v136
    %848 = vmatprep.subr.mxu0 0.0
    %849 = vmatpush1.msra.mxu0 %v135
    %850 = vmatprep.subr.mxu0 0.0
    %851 = vmatpush1.msra.mxu0 %v134
    %852 = vmatprep.subr.mxu0 0.0
    %853 = vmatpush1.msra.mxu0 %v133
    %854 = vmatprep.subr.mxu0 0.0
    %855 = vmatpush1.msra.mxu0 %v132
    %856 = vmatprep.subr.mxu0 0.0
    %857 = vmatpush1.msra.mxu0 %v131
    %858 = vmatprep.subr.mxu0 0.0
    %859 = vmatpush1.msra.mxu0 %v130
    %860 = vmatprep.subr.mxu0 0.0
    %861 = vmatpush1.msra.mxu0 %v129
    %862 = vmatprep.subr.mxu0 0.0
    %863 = vmatpush1.msra.mxu0 %v128
    %864 = vmatprep.subr.mxu0 0.0
    %865 = vmatpush2.msra.mxu0 0.0
    %866 = vmatprep.subr.mxu0 0.0
    %867 = vmatpush2.msra.mxu0 0.0
    %868 = vmatprep.subr.mxu0 0.0
    %869 = vmatpush2.msra.mxu0 0.0
    %870 = vmatprep.subr.mxu0 0.0
    %871 = vmatpush2.msra.mxu0 0.0
    %872 = vmatprep.subr.mxu0 0.0
    %873 = vmatpush2.msra.mxu0 0.0
    %874 = vmatprep.subr.mxu0 0.0
    %875 = vmatpush2.msra.mxu0 0.0
    %876 = vmatprep.subr.mxu0 0.0
    %877 = vmatpush2.msra.mxu0 0.0
    %878 = vmatprep.subr.mxu0 0.0
    %879 = vmatpush2.msra.mxu0 0.0
    %880 = vmatprep.subr.mxu0 0.0
    %881 = vmatpush2.msra.mxu0 0.0
    %882 = vmatprep.subr.mxu0 0.0
    %883 = vmatpush2.msra.mxu0 0.0
    %884 = vmatprep.subr.mxu0 0.0
    %885 = vmatpush2.msra.mxu0 0.0
    %886 = vmatprep.subr.mxu0 0.0
    %887 = vmatpush2.msra.mxu0 0.0
    %888 = vmatprep.subr.mxu0 0.0
    %889 = vmatpush2.msra.mxu0 0.0
    %890 = vmatprep.subr.mxu0 0.0
    %891 = vmatpush2.msra.mxu0 0.0
    %892 = vmatprep.subr.mxu0 0.0
    %893 = vmatpush2.msra.mxu0 0.0
    %894 = vmatprep.subr.mxu0 0.0
    %895 = vmatpush2.msra.mxu0 0.0
    %896 = vmatprep.mubr.f32.mxu0 0.0
    %897 = vmatmul.mubr.f32.gmra.mxu0 %v831
    %v898 = vpop.f32.mrf.mxu0
    %v899 = vadd.f32 0.0, %v898
    %v900 = vpop.f32.mrf.mxu0
    %901 = vdwg.mxu0
    %902 = vmax.xlane.f32.xlu0 %v899
    %v903 = vpop.xlane.xlu0 %902
    %v904 = vmax.f32 %v903, 1e-30
    %v905 = vrsqrt.pop %v904
    %s906 = scalar_lea.vmem [#allocation8], 256
    %v907 = vld [vmem:[%s906] sm:$0xff]
    %v908 = vld [vmem:[%s906 + $0x8] sm:$0xff]
    %v909 = vld [vmem:[%s906 + $0x10] sm:$0xff]
    %v910 = vld [vmem:[%s906 + $0x18] sm:$0xff]
    %v911 = vld [vmem:[%s906 + $0x20] sm:$0xff]
    %v912 = vld [vmem:[%s906 + $0x28] sm:$0xff]
    %v913 = vld [vmem:[%s906 + $0x30] sm:$0xff]
    %v914 = vld [vmem:[%s906 + $0x38] sm:$0xff]
    %v915 = vld [vmem:[%s906 + $0x40] sm:$0xff]
    %v916 = vld [vmem:[%s906 + $0x48] sm:$0xff]
    %v917 = vld [vmem:[%s906 + $0x50] sm:$0xff]
    %v918 = vld [vmem:[%s906 + $0x58] sm:$0xff]
    %v919 = vld [vmem:[%s906 + $0x60] sm:$0xff]
    %v920 = vld [vmem:[%s906 + $0x68] sm:$0xff]
    %v921 = vld [vmem:[%s906 + $0x70] sm:$0xff]
    %v922 = vld [vmem:[%s906 + $0x78] sm:$0xff]
    %v923 = vmul.f32 %v830, %v905
    %s924 = scalar_lea.vmem [#allocation10], 256
    %v925 = vld [vmem:[%s924] sm:$0xff]
    %v926 = vld [vmem:[%s924 + $0x8] sm:$0xff]
    %v927 = vld [vmem:[%s924 + $0x10] sm:$0xff]
    %v928 = vld [vmem:[%s924 + $0x18] sm:$0xff]
    %v929 = vld [vmem:[%s924 + $0x20] sm:$0xff]
    %v930 = vld [vmem:[%s924 + $0x28] sm:$0xff]
    %v931 = vld [vmem:[%s924 + $0x30] sm:$0xff]
    %v932 = vld [vmem:[%s924 + $0x38] sm:$0xff]
    %v933 = vld [vmem:[%s924 + $0x40] sm:$0xff]
    %v934 = vld [vmem:[%s924 + $0x48] sm:$0xff]
    %v935 = vld [vmem:[%s924 + $0x50] sm:$0xff]
    %v936 = vld [vmem:[%s924 + $0x58] sm:$0xff]
    %v937 = vld [vmem:[%s924 + $0x60] sm:$0xff]
    %v938 = vld [vmem:[%s924 + $0x68] sm:$0xff]
    %v939 = vld [vmem:[%s924 + $0x70] sm:$0xff]
    %v940 = vld [vmem:[%s924 + $0x78] sm:$0xff]
    %941 = vmatprep.subr.mxu0 0.0
    %942 = vmatpush1.msra.mxu0 %v940
    %943 = vmatprep.subr.mxu0 0.0
    %944 = vmatpush1.msra.mxu0 %v939
    %945 = vmatprep.subr.mxu0 0.0
    %946 = vmatpush1.msra.mxu0 %v938
    %947 = vmatprep.subr.mxu0 0.0
    %948 = vmatpush1.msra.mxu0 %v937
    %949 = vmatprep.subr.mxu0 0.0
    %950 = vmatpush1.msra.mxu0 %v936
    %951 = vmatprep.subr.mxu0 0.0
    %952 = vmatpush1.msra.mxu0 %v935
    %953 = vmatprep.subr.mxu0 0.0
    %954 = vmatpush1.msra.mxu0 %v934
    %955 = vmatprep.subr.mxu0 0.0
    %956 = vmatpush1.msra.mxu0 %v933
    %957 = vmatprep.subr.mxu0 0.0
    %958 = vmatpush1.msra.mxu0 %v932
    %959 = vmatprep.subr.mxu0 0.0
    %960 = vmatpush1.msra.mxu0 %v931
    %961 = vmatprep.subr.mxu0 0.0
    %962 = vmatpush1.msra.mxu0 %v930
    %963 = vmatprep.subr.mxu0 0.0
    %964 = vmatpush1.msra.mxu0 %v929
    %965 = vmatprep.subr.mxu0 0.0
    %966 = vmatpush1.msra.mxu0 %v928
    %967 = vmatprep.subr.mxu0 0.0
    %968 = vmatpush1.msra.mxu0 %v927
    %969 = vmatprep.subr.mxu0 0.0
    %970 = vmatpush1.msra.mxu0 %v926
    %971 = vmatprep.subr.mxu0 0.0
    %972 = vmatpush1.msra.mxu0 %v925
    %973 = vmatprep.subr.mxu0 0.0
    %974 = vmatpush2.msra.mxu0 0.0
    %975 = vmatprep.subr.mxu0 0.0
    %976 = vmatpush2.msra.mxu0 0.0
    %977 = vmatprep.subr.mxu0 0.0
    %978 = vmatpush2.msra.mxu0 0.0
    %979 = vmatprep.subr.mxu0 0.0
    %980 = vmatpush2.msra.mxu0 0.0
    %981 = vmatprep.subr.mxu0 0.0
    %982 = vmatpush2.msra.mxu0 0.0
    %983 = vmatprep.subr.mxu0 0.0
    %984 = vmatpush2.msra.mxu0 0.0
    %985 = vmatprep.subr.mxu0 0.0
    %986 = vmatpush2.msra.mxu0 0.0
    %987 = vmatprep.subr.mxu0 0.0
    %988 = vmatpush2.msra.mxu0 0.0
    %989 = vmatprep.subr.mxu0 0.0
    %990 = vmatpush2.msra.mxu0 0.0
    %991 = vmatprep.subr.mxu0 0.0
    %992 = vmatpush2.msra.mxu0 0.0
    %993 = vmatprep.subr.mxu0 0.0
    %994 = vmatpush2.msra.mxu0 0.0
    %995 = vmatprep.subr.mxu0 0.0
    %996 = vmatpush2.msra.mxu0 0.0
    %997 = vmatprep.subr.mxu0 0.0
    %998 = vmatpush2.msra.mxu0 0.0
    %999 = vmatprep.subr.mxu0 0.0
    %1000 = vmatpush2.msra.mxu0 0.0
    %1001 = vmatprep.subr.mxu0 0.0
    %1002 = vmatpush2.msra.mxu0 0.0
    %1003 = vmatprep.subr.mxu0 0.0
    %1004 = vmatpush2.msra.mxu0 0.0
    %1005 = vmatprep.mubr.f32.mxu0 0.0
    %1006 = vmatmul.mubr.f32.gmra.mxu0 %v923
    %v1007 = vpop.f32.mrf.mxu0
    %v1008 = vadd.f32 0.0, %v1007
    %v1009 = vpop.f32.mrf.mxu0
    %1010 = vdwg.mxu0
    %1011 = vmatprep.subr.mxu0 0.0
    %1012 = vmatpush1.msra.mxu0 %v922
    %1013 = vmatprep.subr.mxu0 0.0
    %1014 = vmatpush1.msra.mxu0 %v921
    %1015 = vmatprep.subr.mxu0 0.0
    %1016 = vmatpush1.msra.mxu0 %v920
    %1017 = vmatprep.subr.mxu0 0.0
    %1018 = vmatpush1.msra.mxu0 %v919
    %1019 = vmatprep.subr.mxu0 0.0
    %1020 = vmatpush1.msra.mxu0 %v918
    %1021 = vmatprep.subr.mxu0 0.0
    %1022 = vmatpush1.msra.mxu0 %v917
    %1023 = vmatprep.subr.mxu0 0.0
    %1024 = vmatpush1.msra.mxu0 %v916
    %1025 = vmatprep.subr.mxu0 0.0
    %1026 = vmatpush1.msra.mxu0 %v915
    %1027 = vmatprep.subr.mxu0 0.0
    %1028 = vmatpush1.msra.mxu0 %v914
    %1029 = vmatprep.subr.mxu0 0.0
    %1030 = vmatpush1.msra.mxu0 %v913
    %1031 = vmatprep.subr.mxu0 0.0
    %1032 = vmatpush1.msra.mxu0 %v912
    %1033 = vmatprep.subr.mxu0 0.0
    %1034 = vmatpush1.msra.mxu0 %v911
    %1035 = vmatprep.subr.mxu0 0.0
    %1036 = vmatpush1.msra.mxu0 %v910
    %1037 = vmatprep.subr.mxu0 0.0
    %1038 = vmatpush1.msra.mxu0 %v909
    %1039 = vmatprep.subr.mxu0 0.0
    %1040 = vmatpush1.msra.mxu0 %v908
    %1041 = vmatprep.subr.mxu0 0.0
    %1042 = vmatpush1.msra.mxu0 %v907
    %1043 = vmatprep.subr.mxu0 0.0
    %1044 = vmatpush2.msra.mxu0 0.0
    %1045 = vmatprep.subr.mxu0 0.0
    %1046 = vmatpush2.msra.mxu0 0.0
    %1047 = vmatprep.subr.mxu0 0.0
    %1048 = vmatpush2.msra.mxu0 0.0
    %1049 = vmatprep.subr.mxu0 0.0
    %1050 = vmatpush2.msra.mxu0 0.0
    %1051 = vmatprep.subr.mxu0 0.0
    %1052 = vmatpush2.msra.mxu0 0.0
    %1053 = vmatprep.subr.mxu0 0.0
    %1054 = vmatpush2.msra.mxu0 0.0
    %1055 = vmatprep.subr.mxu0 0.0
    %1056 = vmatpush2.msra.mxu0 0.0
    %1057 = vmatprep.subr.mxu0 0.0
    %1058 = vmatpush2.msra.mxu0 0.0
    %1059 = vmatprep.subr.mxu0 0.0
    %1060 = vmatpush2.msra.mxu0 0.0
    %1061 = vmatprep.subr.mxu0 0.0
    %1062 = vmatpush2.msra.mxu0 0.0
    %1063 = vmatprep.subr.mxu0 0.0
    %1064 = vmatpush2.msra.mxu0 0.0
    %1065 = vmatprep.subr.mxu0 0.0
    %1066 = vmatpush2.msra.mxu0 0.0
    %1067 = vmatprep.subr.mxu0 0.0
    %1068 = vmatpush2.msra.mxu0 0.0
    %1069 = vmatprep.subr.mxu0 0.0
    %1070 = vmatpush2.msra.mxu0 0.0
    %1071 = vmatprep.subr.mxu0 0.0
    %1072 = vmatpush2.msra.mxu0 0.0
    %1073 = vmatprep.subr.mxu0 0.0
    %1074 = vmatpush2.msra.mxu0 0.0
    %1075 = vmatprep.mubr.f32.mxu0 0.0
    %1076 = vmatmul.mubr.f32.gmra.mxu0 %v828
    %v1077 = vpop.f32.mrf.mxu0
    %v1078 = vadd.f32 %v1008, %v1077
    %v1079 = vpop.f32.mrf.mxu0
    %1080 = vdwg.mxu0
    %vm1081 = vcmp.gt.f32.partialorder %v1078, 0.0
    %v1082 = vmul.f32 %v1078, 0.05
    %v1083 = vsel %vm1081, %v1078, %v1082
    %s1084 = scalar_lea.vmem [#allocation11], 256
    %v1085 = vld [vmem:[%s1084] sm:$0xff]
    %v1086 = vld [vmem:[%s1084 + $0x8] sm:$0xff]
    %v1087 = vld [vmem:[%s1084 + $0x10] sm:$0xff]
    %v1088 = vld [vmem:[%s1084 + $0x18] sm:$0xff]
    %v1089 = vld [vmem:[%s1084 + $0x20] sm:$0xff]
    %v1090 = vld [vmem:[%s1084 + $0x28] sm:$0xff]
    %v1091 = vld [vmem:[%s1084 + $0x30] sm:$0xff]
    %v1092 = vld [vmem:[%s1084 + $0x38] sm:$0xff]
    %v1093 = vld [vmem:[%s1084 + $0x40] sm:$0xff]
    %v1094 = vld [vmem:[%s1084 + $0x48] sm:$0xff]
    %v1095 = vld [vmem:[%s1084 + $0x50] sm:$0xff]
    %v1096 = vld [vmem:[%s1084 + $0x58] sm:$0xff]
    %v1097 = vld [vmem:[%s1084 + $0x60] sm:$0xff]
    %v1098 = vld [vmem:[%s1084 + $0x68] sm:$0xff]
    %v1099 = vld [vmem:[%s1084 + $0x70] sm:$0xff]
    %v1100 = vld [vmem:[%s1084 + $0x78] sm:$0xff]
    %1101 = vmatprep.subr.mxu0 0.0
    %1102 = vmatpush1.msra.mxu0 %v1100
    %1103 = vmatprep.subr.mxu0 0.0
    %1104 = vmatpush1.msra.mxu0 %v1099
    %1105 = vmatprep.subr.mxu0 0.0
    %1106 = vmatpush1.msra.mxu0 %v1098
    %1107 = vmatprep.subr.mxu0 0.0
    %1108 = vmatpush1.msra.mxu0 %v1097
    %1109 = vmatprep.subr.mxu0 0.0
    %1110 = vmatpush1.msra.mxu0 %v1096
    %1111 = vmatprep.subr.mxu0 0.0
    %1112 = vmatpush1.msra.mxu0 %v1095
    %1113 = vmatprep.subr.mxu0 0.0
    %1114 = vmatpush1.msra.mxu0 %v1094
    %1115 = vmatprep.subr.mxu0 0.0
    %1116 = vmatpush1.msra.mxu0 %v1093
    %1117 = vmatprep.subr.mxu0 0.0
    %1118 = vmatpush1.msra.mxu0 %v1092
    %1119 = vmatprep.subr.mxu0 0.0
    %1120 = vmatpush1.msra.mxu0 %v1091
    %1121 = vmatprep.subr.mxu0 0.0
    %1122 = vmatpush1.msra.mxu0 %v1090
    %1123 = vmatprep.subr.mxu0 0.0
    %1124 = vmatpush1.msra.mxu0 %v1089
    %1125 = vmatprep.subr.mxu0 0.0
    %1126 = vmatpush1.msra.mxu0 %v1088
    %1127 = vmatprep.subr.mxu0 0.0
    %1128 = vmatpush1.msra.mxu0 %v1087
    %1129 = vmatprep.subr.mxu0 0.0
    %1130 = vmatpush1.msra.mxu0 %v1086
    %1131 = vmatprep.subr.mxu0 0.0
    %1132 = vmatpush1.msra.mxu0 %v1085
    %1133 = vmatprep.subr.mxu0 0.0
    %1134 = vmatpush2.msra.mxu0 0.0
    %1135 = vmatprep.subr.mxu0 0.0
    %1136 = vmatpush2.msra.mxu0 0.0
    %1137 = vmatprep.subr.mxu0 0.0
    %1138 = vmatpush2.msra.mxu0 0.0
    %1139 = vmatprep.subr.mxu0 0.0
    %1140 = vmatpush2.msra.mxu0 0.0
    %1141 = vmatprep.subr.mxu0 0.0
    %1142 = vmatpush2.msra.mxu0 0.0
    %1143 = vmatprep.subr.mxu0 0.0
    %1144 = vmatpush2.msra.mxu0 0.0
    %1145 = vmatprep.subr.mxu0 0.0
    %1146 = vmatpush2.msra.mxu0 0.0
    %1147 = vmatprep.subr.mxu0 0.0
    %1148 = vmatpush2.msra.mxu0 0.0
    %1149 = vmatprep.subr.mxu0 0.0
    %1150 = vmatpush2.msra.mxu0 0.0
    %1151 = vmatprep.subr.mxu0 0.0
    %1152 = vmatpush2.msra.mxu0 0.0
    %1153 = vmatprep.subr.mxu0 0.0
    %1154 = vmatpush2.msra.mxu0 0.0
    %1155 = vmatprep.subr.mxu0 0.0
    %1156 = vmatpush2.msra.mxu0 0.0
    %1157 = vmatprep.subr.mxu0 0.0
    %1158 = vmatpush2.msra.mxu0 0.0
    %1159 = vmatprep.subr.mxu0 0.0
    %1160 = vmatpush2.msra.mxu0 0.0
    %1161 = vmatprep.subr.mxu0 0.0
    %1162 = vmatpush2.msra.mxu0 0.0
    %1163 = vmatprep.subr.mxu0 0.0
    %1164 = vmatpush2.msra.mxu0 0.0
    %1165 = vmatprep.mubr.f32.mxu0 0.0
    %1166 = vmatmul.mubr.f32.gmra.mxu0 %v1083
    %v1167 = vpop.f32.mrf.mxu0
    %v1168 = vadd.f32 0.0, %v1167
    %v1169 = vpop.f32.mrf.mxu0
    %1170 = vdwg.mxu0
    %v1171 = vadd.f32 %v824, %v1168
    %s1172 = scalar_lea.vmem [#allocation2], 24
    %v1173 = vld [vmem:[%s1172] sm:$0xff]
    %s1174 = scalar_lea.vmem [#allocation5], 24
    %v1175 = vld [vmem:[%s1174] sm:$0xff]
    %v1176 = vmul.f32 %v1173, %v1173
    %1177 = vmatprep.subr.mxu0 0.0
    %1178 = vmatpush1.msra.mxu0 %v143
    %1179 = vmatprep.subr.mxu0 0.0
    %1180 = vmatpush1.msra.mxu0 %v142
    %1181 = vmatprep.subr.mxu0 0.0
    %1182 = vmatpush1.msra.mxu0 %v141
    %1183 = vmatprep.subr.mxu0 0.0
    %1184 = vmatpush1.msra.mxu0 %v140
    %1185 = vmatprep.subr.mxu0 0.0
    %1186 = vmatpush1.msra.mxu0 %v139
    %1187 = vmatprep.subr.mxu0 0.0
    %1188 = vmatpush1.msra.mxu0 %v138
    %1189 = vmatprep.subr.mxu0 0.0
    %1190 = vmatpush1.msra.mxu0 %v137
    %1191 = vmatprep.subr.mxu0 0.0
    %1192 = vmatpush1.msra.mxu0 %v136
    %1193 = vmatprep.subr.mxu0 0.0
    %1194 = vmatpush1.msra.mxu0 %v135
    %1195 = vmatprep.subr.mxu0 0.0
    %1196 = vmatpush1.msra.mxu0 %v134
    %1197 = vmatprep.subr.mxu0 0.0
    %1198 = vmatpush1.msra.mxu0 %v133
    %1199 = vmatprep.subr.mxu0 0.0
    %1200 = vmatpush1.msra.mxu0 %v132
    %1201 = vmatprep.subr.mxu0 0.0
    %1202 = vmatpush1.msra.mxu0 %v131
    %1203 = vmatprep.subr.mxu0 0.0
    %1204 = vmatpush1.msra.mxu0 %v130
    %1205 = vmatprep.subr.mxu0 0.0
    %1206 = vmatpush1.msra.mxu0 %v129
    %1207 = vmatprep.subr.mxu0 0.0
    %1208 = vmatpush1.msra.mxu0 %v128
    %1209 = vmatprep.subr.mxu0 0.0
    %1210 = vmatpush2.msra.mxu0 0.0
    %1211 = vmatprep.subr.mxu0 0.0
    %1212 = vmatpush2.msra.mxu0 0.0
    %1213 = vmatprep.subr.mxu0 0.0
    %1214 = vmatpush2.msra.mxu0 0.0
    %1215 = vmatprep.subr.mxu0 0.0
    %1216 = vmatpush2.msra.mxu0 0.0
    %1217 = vmatprep.subr.mxu0 0.0
    %1218 = vmatpush2.msra.mxu0 0.0
    %1219 = vmatprep.subr.mxu0 0.0
    %1220 = vmatpush2.msra.mxu0 0.0
    %1221 = vmatprep.subr.mxu0 0.0
    %1222 = vmatpush2.msra.mxu0 0.0
    %1223 = vmatprep.subr.mxu0 0.0
    %1224 = vmatpush2.msra.mxu0 0.0
    %1225 = vmatprep.subr.mxu0 0.0
    %1226 = vmatpush2.msra.mxu0 0.0
    %1227 = vmatprep.subr.mxu0 0.0
    %1228 = vmatpush2.msra.mxu0 0.0
    %1229 = vmatprep.subr.mxu0 0.0
    %1230 = vmatpush2.msra.mxu0 0.0
    %1231 = vmatprep.subr.mxu0 0.0
    %1232 = vmatpush2.msra.mxu0 0.0
    %1233 = vmatprep.subr.mxu0 0.0
    %1234 = vmatpush2.msra.mxu0 0.0
    %1235 = vmatprep.subr.mxu0 0.0
    %1236 = vmatpush2.msra.mxu0 0.0
    %1237 = vmatprep.subr.mxu0 0.0
    %1238 = vmatpush2.msra.mxu0 0.0
    %1239 = vmatprep.subr.mxu0 0.0
    %1240 = vmatpush2.msra.mxu0 0.0
    %1241 = vmatprep.mubr.f32.mxu0 0.0
    %1242 = vmatmul.mubr.f32.gmra.mxu0 %v1176
    %v1243 = vpop.f32.mrf.mxu0
    %v1244 = vadd.f32 0.0, %v1243
    %v1245 = vpop.f32.mrf.mxu0
    %1246 = vdwg.mxu0
    %1247 = vmax.xlane.f32.xlu0 %v1244
    %v1248 = vpop.xlane.xlu0 %1247
    %v1249 = vmax.f32 %v1248, 1e-30
    %v1250 = vrsqrt.pop %v1249
    %s1251 = scalar_lea.vmem [#allocation8], 384
    %v1252 = vld [vmem:[%s1251] sm:$0xff]
    %v1253 = vld [vmem:[%s1251 + $0x8] sm:$0xff]
    %v1254 = vld [vmem:[%s1251 + $0x10] sm:$0xff]
    %v1255 = vld [vmem:[%s1251 + $0x18] sm:$0xff]
    %v1256 = vld [vmem:[%s1251 + $0x20] sm:$0xff]
    %v1257 = vld [vmem:[%s1251 + $0x28] sm:$0xff]
    %v1258 = vld [vmem:[%s1251 + $0x30] sm:$0xff]
    %v1259 = vld [vmem:[%s1251 + $0x38] sm:$0xff]
    %v1260 = vld [vmem:[%s1251 + $0x40] sm:$0xff]
    %v1261 = vld [vmem:[%s1251 + $0x48] sm:$0xff]
    %v1262 = vld [vmem:[%s1251 + $0x50] sm:$0xff]
    %v1263 = vld [vmem:[%s1251 + $0x58] sm:$0xff]
    %v1264 = vld [vmem:[%s1251 + $0x60] sm:$0xff]
    %v1265 = vld [vmem:[%s1251 + $0x68] sm:$0xff]
    %v1266 = vld [vmem:[%s1251 + $0x70] sm:$0xff]
    %v1267 = vld [vmem:[%s1251 + $0x78] sm:$0xff]
    %v1268 = vmul.f32 %v1175, %v1250
    %s1269 = scalar_lea.vmem [#allocation10], 384
    %v1270 = vld [vmem:[%s1269] sm:$0xff]
    %v1271 = vld [vmem:[%s1269 + $0x8] sm:$0xff]
    %v1272 = vld [vmem:[%s1269 + $0x10] sm:$0xff]
    %v1273 = vld [vmem:[%s1269 + $0x18] sm:$0xff]
    %v1274 = vld [vmem:[%s1269 + $0x20] sm:$0xff]
    %v1275 = vld [vmem:[%s1269 + $0x28] sm:$0xff]
    %v1276 = vld [vmem:[%s1269 + $0x30] sm:$0xff]
    %v1277 = vld [vmem:[%s1269 + $0x38] sm:$0xff]
    %v1278 = vld [vmem:[%s1269 + $0x40] sm:$0xff]
    %v1279 = vld [vmem:[%s1269 + $0x48] sm:$0xff]
    %v1280 = vld [vmem:[%s1269 + $0x50] sm:$0xff]
    %v1281 = vld [vmem:[%s1269 + $0x58] sm:$0xff]
    %v1282 = vld [vmem:[%s1269 + $0x60] sm:$0xff]
    %v1283 = vld [vmem:[%s1269 + $0x68] sm:$0xff]
    %v1284 = vld [vmem:[%s1269 + $0x70] sm:$0xff]
    %v1285 = vld [vmem:[%s1269 + $0x78] sm:$0xff]
    %1286 = vmatprep.subr.mxu0 0.0
    %1287 = vmatpush1.msra.mxu0 %v1285
    %1288 = vmatprep.subr.mxu0 0.0
    %1289 = vmatpush1.msra.mxu0 %v1284
    %1290 = vmatprep.subr.mxu0 0.0
    %1291 = vmatpush1.msra.mxu0 %v1283
    %1292 = vmatprep.subr.mxu0 0.0
    %1293 = vmatpush1.msra.mxu0 %v1282
    %1294 = vmatprep.subr.mxu0 0.0
    %1295 = vmatpush1.msra.mxu0 %v1281
    %1296 = vmatprep.subr.mxu0 0.0
    %1297 = vmatpush1.msra.mxu0 %v1280
    %1298 = vmatprep.subr.mxu0 0.0
    %1299 = vmatpush1.msra.mxu0 %v1279
    %1300 = vmatprep.subr.mxu0 0.0
    %1301 = vmatpush1.msra.mxu0 %v1278
    %1302 = vmatprep.subr.mxu0 0.0
    %1303 = vmatpush1.msra.mxu0 %v1277
    %1304 = vmatprep.subr.mxu0 0.0
    %1305 = vmatpush1.msra.mxu0 %v1276
    %1306 = vmatprep.subr.mxu0 0.0
    %1307 = vmatpush1.msra.mxu0 %v1275
    %1308 = vmatprep.subr.mxu0 0.0
    %1309 = vmatpush1.msra.mxu0 %v1274
    %1310 = vmatprep.subr.mxu0 0.0
    %1311 = vmatpush1.msra.mxu0 %v1273
    %1312 = vmatprep.subr.mxu0 0.0
    %1313 = vmatpush1.msra.mxu0 %v1272
    %1314 = vmatprep.subr.mxu0 0.0
    %1315 = vmatpush1.msra.mxu0 %v1271
    %1316 = vmatprep.subr.mxu0 0.0
    %1317 = vmatpush1.msra.mxu0 %v1270
    %1318 = vmatprep.subr.mxu0 0.0
    %1319 = vmatpush2.msra.mxu0 0.0
    %1320 = vmatprep.subr.mxu0 0.0
    %1321 = vmatpush2.msra.mxu0 0.0
    %1322 = vmatprep.subr.mxu0 0.0
    %1323 = vmatpush2.msra.mxu0 0.0
    %1324 = vmatprep.subr.mxu0 0.0
    %1325 = vmatpush2.msra.mxu0 0.0
    %1326 = vmatprep.subr.mxu0 0.0
    %1327 = vmatpush2.msra.mxu0 0.0
    %1328 = vmatprep.subr.mxu0 0.0
    %1329 = vmatpush2.msra.mxu0 0.0
    %1330 = vmatprep.subr.mxu0 0.0
    %1331 = vmatpush2.msra.mxu0 0.0
    %1332 = vmatprep.subr.mxu0 0.0
    %1333 = vmatpush2.msra.mxu0 0.0
    %1334 = vmatprep.subr.mxu0 0.0
    %1335 = vmatpush2.msra.mxu0 0.0
    %1336 = vmatprep.subr.mxu0 0.0
    %1337 = vmatpush2.msra.mxu0 0.0
    %1338 = vmatprep.subr.mxu0 0.0
    %1339 = vmatpush2.msra.mxu0 0.0
    %1340 = vmatprep.subr.mxu0 0.0
    %1341 = vmatpush2.msra.mxu0 0.0
    %1342 = vmatprep.subr.mxu0 0.0
    %1343 = vmatpush2.msra.mxu0 0.0
    %1344 = vmatprep.subr.mxu0 0.0
    %1345 = vmatpush2.msra.mxu0 0.0
    %1346 = vmatprep.subr.mxu0 0.0
    %1347 = vmatpush2.msra.mxu0 0.0
    %1348 = vmatprep.subr.mxu0 0.0
    %1349 = vmatpush2.msra.mxu0 0.0
    %1350 = vmatprep.mubr.f32.mxu0 0.0
    %1351 = vmatmul.mubr.f32.gmra.mxu0 %v1268
    %v1352 = vpop.f32.mrf.mxu0
    %v1353 = vadd.f32 0.0, %v1352
    %v1354 = vpop.f32.mrf.mxu0
    %1355 = vdwg.mxu0
    %1356 = vmatprep.subr.mxu0 0.0
    %1357 = vmatpush1.msra.mxu0 %v1267
    %1358 = vmatprep.subr.mxu0 0.0
    %1359 = vmatpush1.msra.mxu0 %v1266
    %1360 = vmatprep.subr.mxu0 0.0
    %1361 = vmatpush1.msra.mxu0 %v1265
    %1362 = vmatprep.subr.mxu0 0.0
    %1363 = vmatpush1.msra.mxu0 %v1264
    %1364 = vmatprep.subr.mxu0 0.0
    %1365 = vmatpush1.msra.mxu0 %v1263
    %1366 = vmatprep.subr.mxu0 0.0
    %1367 = vmatpush1.msra.mxu0 %v1262
    %1368 = vmatprep.subr.mxu0 0.0
    %1369 = vmatpush1.msra.mxu0 %v1261
    %1370 = vmatprep.subr.mxu0 0.0
    %1371 = vmatpush1.msra.mxu0 %v1260
    %1372 = vmatprep.subr.mxu0 0.0
    %1373 = vmatpush1.msra.mxu0 %v1259
    %1374 = vmatprep.subr.mxu0 0.0
    %1375 = vmatpush1.msra.mxu0 %v1258
    %1376 = vmatprep.subr.mxu0 0.0
    %1377 = vmatpush1.msra.mxu0 %v1257
    %1378 = vmatprep.subr.mxu0 0.0
    %1379 = vmatpush1.msra.mxu0 %v1256
    %1380 = vmatprep.subr.mxu0 0.0
    %1381 = vmatpush1.msra.mxu0 %v1255
    %1382 = vmatprep.subr.mxu0 0.0
    %1383 = vmatpush1.msra.mxu0 %v1254
    %1384 = vmatprep.subr.mxu0 0.0
    %1385 = vmatpush1.msra.mxu0 %v1253
    %1386 = vmatprep.subr.mxu0 0.0
    %1387 = vmatpush1.msra.mxu0 %v1252
    %1388 = vmatprep.subr.mxu0 0.0
    %1389 = vmatpush2.msra.mxu0 0.0
    %1390 = vmatprep.subr.mxu0 0.0
    %1391 = vmatpush2.msra.mxu0 0.0
    %1392 = vmatprep.subr.mxu0 0.0
    %1393 = vmatpush2.msra.mxu0 0.0
    %1394 = vmatprep.subr.mxu0 0.0
    %1395 = vmatpush2.msra.mxu0 0.0
    %1396 = vmatprep.subr.mxu0 0.0
    %1397 = vmatpush2.msra.mxu0 0.0
    %1398 = vmatprep.subr.mxu0 0.0
    %1399 = vmatpush2.msra.mxu0 0.0
    %1400 = vmatprep.subr.mxu0 0.0
    %1401 = vmatpush2.msra.mxu0 0.0
    %1402 = vmatprep.subr.mxu0 0.0
    %1403 = vmatpush2.msra.mxu0 0.0
    %1404 = vmatprep.subr.mxu0 0.0
    %1405 = vmatpush2.msra.mxu0 0.0
    %1406 = vmatprep.subr.mxu0 0.0
    %1407 = vmatpush2.msra.mxu0 0.0
    %1408 = vmatprep.subr.mxu0 0.0
    %1409 = vmatpush2.msra.mxu0 0.0
    %1410 = vmatprep.subr.mxu0 0.0
    %1411 = vmatpush2.msra.mxu0 0.0
    %1412 = vmatprep.subr.mxu0 0.0
    %1413 = vmatpush2.msra.mxu0 0.0
    %1414 = vmatprep.subr.mxu0 0.0
    %1415 = vmatpush2.msra.mxu0 0.0
    %1416 = vmatprep.subr.mxu0 0.0
    %1417 = vmatpush2.msra.mxu0 0.0
    %1418 = vmatprep.subr.mxu0 0.0
    %1419 = vmatpush2.msra.mxu0 0.0
    %1420 = vmatprep.mubr.f32.mxu0 0.0
    %1421 = vmatmul.mubr.f32.gmra.mxu0 %v1173
    %v1422 = vpop.f32.mrf.mxu0
    %v1423 = vadd.f32 %v1353, %v1422
    %v1424 = vpop.f32.mrf.mxu0
    %1425 = vdwg.mxu0
    %vm1426 = vcmp.gt.f32.partialorder %v1423, 0.0
    %v1427 = vmul.f32 %v1423, 0.05
    %v1428 = vsel %vm1426, %v1423, %v1427
    %s1429 = scalar_lea.vmem [#allocation11], 384
    %v1430 = vld [vmem:[%s1429] sm:$0xff]
    %v1431 = vld [vmem:[%s1429 + $0x8] sm:$0xff]
    %v1432 = vld [vmem:[%s1429 + $0x10] sm:$0xff]
    %v1433 = vld [vmem:[%s1429 + $0x18] sm:$0xff]
    %v1434 = vld [vmem:[%s1429 + $0x20] sm:$0xff]
    %v1435 = vld [vmem:[%s1429 + $0x28] sm:$0xff]
    %v1436 = vld [vmem:[%s1429 + $0x30] sm:$0xff]
    %v1437 = vld [vmem:[%s1429 + $0x38] sm:$0xff]
    %v1438 = vld [vmem:[%s1429 + $0x40] sm:$0xff]
    %v1439 = vld [vmem:[%s1429 + $0x48] sm:$0xff]
    %v1440 = vld [vmem:[%s1429 + $0x50] sm:$0xff]
    %v1441 = vld [vmem:[%s1429 + $0x58] sm:$0xff]
    %v1442 = vld [vmem:[%s1429 + $0x60] sm:$0xff]
    %v1443 = vld [vmem:[%s1429 + $0x68] sm:$0xff]
    %v1444 = vld [vmem:[%s1429 + $0x70] sm:$0xff]
    %v1445 = vld [vmem:[%s1429 + $0x78] sm:$0xff]
    %1446 = vmatprep.subr.mxu0 0.0
    %1447 = vmatpush1.msra.mxu0 %v1445
    %1448 = vmatprep.subr.mxu0 0.0
    %1449 = vmatpush1.msra.mxu0 %v1444
    %1450 = vmatprep.subr.mxu0 0.0
    %1451 = vmatpush1.msra.mxu0 %v1443
    %1452 = vmatprep.subr.mxu0 0.0
    %1453 = vmatpush1.msra.mxu0 %v1442
    %1454 = vmatprep.subr.mxu0 0.0
    %1455 = vmatpush1.msra.mxu0 %v1441
    %1456 = vmatprep.subr.mxu0 0.0
    %1457 = vmatpush1.msra.mxu0 %v1440
    %1458 = vmatprep.subr.mxu0 0.0
    %1459 = vmatpush1.msra.mxu0 %v1439
    %1460 = vmatprep.subr.mxu0 0.0
    %1461 = vmatpush1.msra.mxu0 %v1438
    %1462 = vmatprep.subr.mxu0 0.0
    %1463 = vmatpush1.msra.mxu0 %v1437
    %1464 = vmatprep.subr.mxu0 0.0
    %1465 = vmatpush1.msra.mxu0 %v1436
    %1466 = vmatprep.subr.mxu0 0.0
    %1467 = vmatpush1.msra.mxu0 %v1435
    %1468 = vmatprep.subr.mxu0 0.0
    %1469 = vmatpush1.msra.mxu0 %v1434
    %1470 = vmatprep.subr.mxu0 0.0
    %1471 = vmatpush1.msra.mxu0 %v1433
    %1472 = vmatprep.subr.mxu0 0.0
    %1473 = vmatpush1.msra.mxu0 %v1432
    %1474 = vmatprep.subr.mxu0 0.0
    %1475 = vmatpush1.msra.mxu0 %v1431
    %1476 = vmatprep.subr.mxu0 0.0
    %1477 = vmatpush1.msra.mxu0 %v1430
    %1478 = vmatprep.subr.mxu0 0.0
    %1479 = vmatpush2.msra.mxu0 0.0
    %1480 = vmatprep.subr.mxu0 0.0
    %1481 = vmatpush2.msra.mxu0 0.0
    %1482 = vmatprep.subr.mxu0 0.0
    %1483 = vmatpush2.msra.mxu0 0.0
    %1484 = vmatprep.subr.mxu0 0.0
    %1485 = vmatpush2.msra.mxu0 0.0
    %1486 = vmatprep.subr.mxu0 0.0
    %1487 = vmatpush2.msra.mxu0 0.0
    %1488 = vmatprep.subr.mxu0 0.0
    %1489 = vmatpush2.msra.mxu0 0.0
    %1490 = vmatprep.subr.mxu0 0.0
    %1491 = vmatpush2.msra.mxu0 0.0
    %1492 = vmatprep.subr.mxu0 0.0
    %1493 = vmatpush2.msra.mxu0 0.0
    %1494 = vmatprep.subr.mxu0 0.0
    %1495 = vmatpush2.msra.mxu0 0.0
    %1496 = vmatprep.subr.mxu0 0.0
    %1497 = vmatpush2.msra.mxu0 0.0
    %1498 = vmatprep.subr.mxu0 0.0
    %1499 = vmatpush2.msra.mxu0 0.0
    %1500 = vmatprep.subr.mxu0 0.0
    %1501 = vmatpush2.msra.mxu0 0.0
    %1502 = vmatprep.subr.mxu0 0.0
    %1503 = vmatpush2.msra.mxu0 0.0
    %1504 = vmatprep.subr.mxu0 0.0
    %1505 = vmatpush2.msra.mxu0 0.0
    %1506 = vmatprep.subr.mxu0 0.0
    %1507 = vmatpush2.msra.mxu0 0.0
    %1508 = vmatprep.subr.mxu0 0.0
    %1509 = vmatpush2.msra.mxu0 0.0
    %1510 = vmatprep.mubr.f32.mxu0 0.0
    %1511 = vmatmul.mubr.f32.gmra.mxu0 %v1428
    %v1512 = vpop.f32.mrf.mxu0
    %v1513 = vadd.f32 0.0, %v1512
    %v1514 = vpop.f32.mrf.mxu0
    %1515 = vdwg.mxu0
    %v1516 = vadd.f32 %v1171, %v1513
    %v1517 = vld [vmem:[%s6] sm:$0x1]
    %v1519 = vlaneseq
    %v1520 = vshrl.u32 %v1519, 7
    %v1521 = vsub.s32 0, %v1520
    %v1522 = vrot.slane %v1517, %v1521
    %v1524 = vadd.f32 %v1516, %v1522
    %vm1525 = vcmp.gt.f32.partialorder %v1524, 0.0
    %v1526 = vmul.f32 %v1524, 0.05
    %v1527 = vsel %vm1525, %v1524, %v1526
    %v1528 = vld [vmem:[#allocation13] sm:$0xff]
    %v1529 = vld [vmem:[#allocation13 + $0x8] sm:$0xff]
    %v1530 = vld [vmem:[#allocation13 + $0x10] sm:$0xff]
    %v1531 = vld [vmem:[#allocation13 + $0x18] sm:$0xff]
    %v1532 = vld [vmem:[#allocation13 + $0x20] sm:$0xff]
    %v1533 = vld [vmem:[#allocation13 + $0x28] sm:$0xff]
    %v1534 = vld [vmem:[#allocation13 + $0x30] sm:$0xff]
    %v1535 = vld [vmem:[#allocation13 + $0x38] sm:$0xff]
    %v1536 = vld [vmem:[#allocation13 + $0x40] sm:$0xff]
    %v1537 = vld [vmem:[#allocation13 + $0x48] sm:$0xff]
    %v1538 = vld [vmem:[#allocation13 + $0x50] sm:$0xff]
    %v1539 = vld [vmem:[#allocation13 + $0x58] sm:$0xff]
    %v1540 = vld [vmem:[#allocation13 + $0x60] sm:$0xff]
    %v1541 = vld [vmem:[#allocation13 + $0x68] sm:$0xff]
    %v1542 = vld [vmem:[#allocation13 + $0x70] sm:$0xff]
    %v1543 = vld [vmem:[#allocation13 + $0x78] sm:$0xff]
    %v1544 = vld [vmem:[%s8] sm:$0x1]
    %v1546 = vlaneseq
    %v1547 = vshrl.u32 %v1546, 7
    %v1548 = vsub.s32 0, %v1547
    %v1549 = vrot.slane %v1544, %v1548
    %1551 = vmatprep.subr.mxu0 0.0
    %1552 = vmatpush1.msra.mxu0 %v1543
    %1553 = vmatprep.subr.mxu0 0.0
    %1554 = vmatpush1.msra.mxu0 %v1542
    %1555 = vmatprep.subr.mxu0 0.0
    %1556 = vmatpush1.msra.mxu0 %v1541
    %1557 = vmatprep.subr.mxu0 0.0
    %1558 = vmatpush1.msra.mxu0 %v1540
    %1559 = vmatprep.subr.mxu0 0.0
    %1560 = vmatpush1.msra.mxu0 %v1539
    %1561 = vmatprep.subr.mxu0 0.0
    %1562 = vmatpush1.msra.mxu0 %v1538
    %1563 = vmatprep.subr.mxu0 0.0
    %1564 = vmatpush1.msra.mxu0 %v1537
    %1565 = vmatprep.subr.mxu0 0.0
    %1566 = vmatpush1.msra.mxu0 %v1536
    %1567 = vmatprep.subr.mxu0 0.0
    %1568 = vmatpush1.msra.mxu0 %v1535
    %1569 = vmatprep.subr.mxu0 0.0
    %1570 = vmatpush1.msra.mxu0 %v1534
    %1571 = vmatprep.subr.mxu0 0.0
    %1572 = vmatpush1.msra.mxu0 %v1533
    %1573 = vmatprep.subr.mxu0 0.0
    %1574 = vmatpush1.msra.mxu0 %v1532
    %1575 = vmatprep.subr.mxu0 0.0
    %1576 = vmatpush1.msra.mxu0 %v1531
    %1577 = vmatprep.subr.mxu0 0.0
    %1578 = vmatpush1.msra.mxu0 %v1530
    %1579 = vmatprep.subr.mxu0 0.0
    %1580 = vmatpush1.msra.mxu0 %v1529
    %1581 = vmatprep.subr.mxu0 0.0
    %1582 = vmatpush1.msra.mxu0 %v1528
    %1583 = vmatprep.subr.mxu0 0.0
    %1584 = vmatpush2.msra.mxu0 0.0
    %1585 = vmatprep.subr.mxu0 0.0
    %1586 = vmatpush2.msra.mxu0 0.0
    %1587 = vmatprep.subr.mxu0 0.0
    %1588 = vmatpush2.msra.mxu0 0.0
    %1589 = vmatprep.subr.mxu0 0.0
    %1590 = vmatpush2.msra.mxu0 0.0
    %1591 = vmatprep.subr.mxu0 0.0
    %1592 = vmatpush2.msra.mxu0 0.0
    %1593 = vmatprep.subr.mxu0 0.0
    %1594 = vmatpush2.msra.mxu0 0.0
    %1595 = vmatprep.subr.mxu0 0.0
    %1596 = vmatpush2.msra.mxu0 0.0
    %1597 = vmatprep.subr.mxu0 0.0
    %1598 = vmatpush2.msra.mxu0 0.0
    %1599 = vmatprep.subr.mxu0 0.0
    %1600 = vmatpush2.msra.mxu0 0.0
    %1601 = vmatprep.subr.mxu0 0.0
    %1602 = vmatpush2.msra.mxu0 0.0
    %1603 = vmatprep.subr.mxu0 0.0
    %1604 = vmatpush2.msra.mxu0 0.0
    %1605 = vmatprep.subr.mxu0 0.0
    %1606 = vmatpush2.msra.mxu0 0.0
    %1607 = vmatprep.subr.mxu0 0.0
    %1608 = vmatpush2.msra.mxu0 0.0
    %1609 = vmatprep.subr.mxu0 0.0
    %1610 = vmatpush2.msra.mxu0 0.0
    %1611 = vmatprep.subr.mxu0 0.0
    %1612 = vmatpush2.msra.mxu0 0.0
    %1613 = vmatprep.subr.mxu0 0.0
    %1614 = vmatpush2.msra.mxu0 0.0
    %1615 = vmatprep.mubr.f32.mxu0 0.0
    %1616 = vmatmul.mubr.f32.gmra.mxu0 %v1527
    %v1617 = vpop.f32.mrf.mxu0
    %v1618 = vadd.f32 %v1549, %v1617
    %v1619 = vpop.f32.mrf.mxu0
    %1620 = vdwg.mxu0
    %1621 = vst [vmem:[#allocation14] sm:$0xff] %v1618
    // Predicated region
    $region66: #{tpu_custom_call.1} parent=1 // pred_check
      _
    $region67: #{tpu_custom_call.1} parent=1 // pred_check_branch
      %1623 = sbr.rel (0) target = $region69
    $region68: #{tpu_custom_call.1} parent=1 // pred_region
      %s1625 = ssub.s32 128, 128
      %1626 = vsyncadd [#allocation4], %s1625
      %s1628 = sshll.u32 [#allocation14], 4
      %s1629 = int_to_ptr.vmem [resolvable:$true] %s1628
      %1631 = dma.vmem_to_hbm [thread:$0]  %s1629, 128, %s9, [#allocation4]
    $region69: #{tpu_custom_call.1} parent=1 // pred_fallthru
      _
    // Predicated region
    $region70: #{tpu_custom_call.1} parent=1 // pred_check
      _
    $region71: #{tpu_custom_call.1} parent=1 // pred_check_branch
      %1633 = sbr.rel (0) target = $region73
    $region72: #{tpu_custom_call.1} parent=1 // pred_region
      %1634 = dma.done [#allocation4], 128
    $region73: #{tpu_custom_call.1} parent=1 // pred_fallthru
      _
    %1635 = vsyncpa [#allocation3], 1
    %1636 = vsyncpa [#allocation6], 1
    %1637 = vsyncpa [#allocation9], 1
    %1638 = vsyncpa [#allocation12], 1
    %1639 = vsyncpa [#allocation4], 1

</llo_original>
